<compile_context>
chip_gen: v6e
topology: v6e:2x2x1
jax: 0.10.0
libtpu: 0.0.40
codegen_flags: <defaults>
</compile_context>

<pallas_src>
import jax
import jax.numpy as jnp
from jax.experimental import pallas as pl
from jax.experimental.pallas import tpu as pltpu


# --------------------------------- kernel ---------------------------------- #
def _tlstm_kernel(x2d_ref, tfeat_ref, h0_ref, c0_ref,
                  u4_ref, v4_ref, b4_ref, wfc_ref, bfc_ref,
                  hseq_ref, hT_ref, cT_ref,
                  xproj_ref):
    """Whole TLSTM recurrence in one grid-less invocation (everything VMEM).

    x2d_ref   : (S*B, I)   bf16  time-major flattened inputs
    tfeat_ref : (B, S)     f32   last input feature channel ("time" signal)
    h0/c0     : (B, H)     f32   initial states
    u4/v4     : (I,4H)/(H,4H) bf16 fused gate weights (order i|f|c|o)
    b4        : (1, 4H)    f32   fused gate bias
    wfc/bfc   : (S, H) bf16 / (1, H) f32  the `self.FC` projection of a_t
    hseq_ref  : (S, B, H)  f32   output hidden sequence (time-major)
    hT/cT     : (B, H)     f32   final states
    xproj_ref : (S, B, 4H) f32   scratch: hoisted x_t @ U4 + b4 for all t
    """
    S, B, H = hseq_ref.shape
    G = 4 * H

    # ------- hoisted, loop-invariant loads / broadcasts --------------------
    u4 = u4_ref[...]
    v4 = v4_ref[...]
    b4 = b4_ref[...]
    wfc = wfc_ref[...]
    bfc = jnp.broadcast_to(bfc_ref[...], (B, H))          # hoist broadcast
    tfeat = tfeat_ref[...]                                # (B, S) f32

    # One MXU pass projects every timestep's input through the fused gate
    # weights: (S*B, I) @ (I, 4H) -> (S*B, 4H); bias added once here.
    xproj = jnp.dot(x2d_ref[...], u4, preferred_element_type=jnp.float32)
    xproj_ref[...] = (xproj + b4).reshape(S, B, G)

    def step(t, carry):
        h, c, last = carry                                # f32 carries
        # Reference semantics: a_0 = T, a_t = T - a_{t-1} (last0 = 0).
        a_raw = tfeat - last                              # (B, S)
        a = jnp.dot(a_raw.astype(wfc.dtype), wfc,
                    preferred_element_type=jnp.float32) + bfc      # (B, H)

        gates = xproj_ref[t] + jnp.dot(h.astype(v4.dtype), v4,
                                       preferred_element_type=jnp.float32)
        i_t = jax.nn.sigmoid(gates[:, 0 * H:1 * H])
        f_t = jax.nn.sigmoid(gates[:, 1 * H:2 * H]) * a
        g_t = jnp.tanh(gates[:, 2 * H:3 * H]) * (1.0 - a)
        o_t = jax.nn.sigmoid(gates[:, 3 * H:4 * H])

        c_new = f_t * c + i_t * g_t
        h_new = o_t * jnp.tanh(c_new)
        hseq_ref[t] = h_new                               # dense leading-axis store
        return (h_new, c_new, a_raw)

    init = (h0_ref[...], c0_ref[...], jnp.zeros_like(tfeat))
    hT, cT, _ = jax.lax.fori_loop(0, S, step, init, unroll=True)
    hT_ref[...] = hT
    cT_ref[...] = cT


# -------------------------------- wrapper ----------------------------------- #
def tlstm_forward(x, params, init_states=None):
    """Pallas implementation of TLSTM.forward.

    x:      (B, S, input_sz) f32
    params: dict of U_*/V_*/b_* gate weights plus W_fc/b_fc for `self.FC`
    returns (hidden_seq (B, S, H), (h_T (B, H), c_T (B, H)))
    """
    B, S, I = x.shape
    H = params["V_i"].shape[0]

    # Fuse the four gates along the output dim (lane-dense 4H).
    u4 = jnp.concatenate([params["U_i"], params["U_f"],
                          params["U_c"], params["U_o"]], axis=1).astype(jnp.bfloat16)
    v4 = jnp.concatenate([params["V_i"], params["V_f"],
                          params["V_c"], params["V_o"]], axis=1).astype(jnp.bfloat16)
    b4 = jnp.concatenate([params["b_i"], params["b_f"],
                          params["b_c"], params["b_o"]],
                         axis=0).reshape(1, 4 * H).astype(jnp.float32)
    wfc = params["W_fc"].astype(jnp.bfloat16)             # (S, H)
    bfc = params["b_fc"].reshape(1, H).astype(jnp.float32)

    # "time" signal = last input feature channel for all timesteps.
    tfeat = x[:, :, -1].astype(jnp.float32)               # (B, S)
    # time-major flattened inputs so the kernel projects all steps at once.
    x2d = jnp.transpose(x, (1, 0, 2)).reshape(S * B, I).astype(jnp.bfloat16)

    if init_states is None:
        h0 = jnp.zeros((B, H), jnp.float32)
        c0 = jnp.zeros((B, H), jnp.float32)
    else:
        h0, c0 = init_states
        h0 = h0.astype(jnp.float32)
        c0 = c0.astype(jnp.float32)

    hseq_tm, hT, cT = pl.pallas_call(
        _tlstm_kernel,
        out_shape=(jax.ShapeDtypeStruct((S, B, H), jnp.float32),   # hidden_seq (time-major)
                   jax.ShapeDtypeStruct((B, H), jnp.float32),      # h_T
                   jax.ShapeDtypeStruct((B, H), jnp.float32)),     # c_T
        scratch_shapes=[pltpu.VMEM((S, B, 4 * H), jnp.float32)],   # hoisted x-projections
    )(x2d, tfeat, h0, c0, u4, v4, b4, wfc, bfc)

    # (S, B, H) -> (B, S, H); an 8 KiB metadata-scale op at these shapes.
    hidden_seq = jnp.transpose(hseq_tm, (1, 0, 2))
    return hidden_seq, (hT, cT)


# ----------------------------- param builder -------------------------------- #
def init_params(key, input_sz, hidden_sz, seq_sz):
    # TODO(synk): the reference's `self.init_weights()` is undefined; using
    # uniform(-0.1, 0.1) init here.
    keys = jax.random.split(key, 14)
    u = lambda k, s: jax.random.uniform(k, s, jnp.float32, -0.1, 0.1)
    return {
        "U_i": u(keys[0], (input_sz, hidden_sz)),
        "V_i": u(keys[1], (hidden_sz, hidden_sz)),
        "b_i": u(keys[2], (hidden_sz,)),
        "U_f": u(keys[3], (input_sz, hidden_sz)),
        "V_f": u(keys[4], (hidden_sz, hidden_sz)),
        "b_f": u(keys[5], (hidden_sz,)),
        "U_c": u(keys[6], (input_sz, hidden_sz)),
        "V_c": u(keys[7], (hidden_sz, hidden_sz)),
        "b_c": u(keys[8], (hidden_sz,)),
        "U_o": u(keys[9], (input_sz, hidden_sz)),
        "V_o": u(keys[10], (hidden_sz, hidden_sz)),
        "b_o": u(keys[11], (hidden_sz,)),
        # TODO(synk): `self.FC` is undefined in the reference module; modeled
        # as a Linear(seq_sz -> hidden_sz) over the (B, S) time signal, the
        # only shape-consistent reading of the original code.
        "W_fc": u(keys[12], (seq_sz, hidden_sz)),
        "b_fc": u(keys[13], (hidden_sz,)),
    }


# ----------------------------------- main ------------------------------------ #
if __name__ == "__main__":
    B, S, I, H = 8, 8, 16, 32      # batch, seq, input_sz, hidden_sz (4H = 128)

    key = jax.random.PRNGKey(0)
    kp, kx = jax.random.split(key)
    params = init_params(kp, I, H, S)
    x = jax.random.normal(kx, (B, S, I), jnp.float32)

    fwd = jax.jit(tlstm_forward)
    hidden_seq, (hT, cT) = fwd(x, params)
    hidden_seq, hT, cT = jax.block_until_ready((hidden_seq, hT, cT))

    assert hidden_seq.shape == (B, S, H), hidden_seq.shape
    assert hT.shape == (B, H) and cT.shape == (B, H)
    assert bool(jnp.all(jnp.isfinite(hidden_seq)))
    assert bool(jnp.all(jnp.isfinite(hT))) and bool(jnp.all(jnp.isfinite(cT)))
    # final hidden of the sequence must equal the returned h_T
    assert bool(jnp.allclose(hidden_seq[:, -1, :], hT, atol=1e-5, rtol=1e-5))
    print("KERNEL_OK")
</pallas_src>

<mosaic_0001>
module attributes {stable_mosaic.version = 11 : i64} {
  func.func @_tlstm_kernel(%arg0: memref<64x16xbf16, #tpu.memory_space<vmem>>, %arg1: memref<8x8xf32, #tpu.memory_space<vmem>>, %arg2: memref<8x32xf32, #tpu.memory_space<vmem>>, %arg3: memref<8x32xf32, #tpu.memory_space<vmem>>, %arg4: memref<16x128xbf16, #tpu.memory_space<vmem>>, %arg5: memref<32x128xbf16, #tpu.memory_space<vmem>>, %arg6: memref<1x128xf32, #tpu.memory_space<vmem>>, %arg7: memref<8x32xbf16, #tpu.memory_space<vmem>>, %arg8: memref<1x32xf32, #tpu.memory_space<vmem>>, %arg9: memref<8x8x32xf32, #tpu.memory_space<vmem>>, %arg10: memref<8x32xf32, #tpu.memory_space<vmem>>, %arg11: memref<8x32xf32, #tpu.memory_space<vmem>>, %arg12: memref<8x8x128xf32, #tpu.memory_space<vmem>>) attributes {dimension_semantics = [], scalar_prefetch = 0 : i64, scratch_operands = 1 : i64, tpu.core_type = #tpu.core_type<tc>} {
    %c0 = arith.constant 0 : index
    %c0_0 = arith.constant 0 : index
    %0 = vector.load %arg4[%c0, %c0_0] : memref<16x128xbf16, #tpu.memory_space<vmem>>, vector<16x128xbf16>
    %c0_1 = arith.constant 0 : index
    %c0_2 = arith.constant 0 : index
    %1 = vector.load %arg5[%c0_1, %c0_2] : memref<32x128xbf16, #tpu.memory_space<vmem>>, vector<32x128xbf16>
    %c0_3 = arith.constant 0 : index
    %c0_4 = arith.constant 0 : index
    %2 = vector.load %arg6[%c0_3, %c0_4] : memref<1x128xf32, #tpu.memory_space<vmem>>, vector<1x128xf32>
    %c0_5 = arith.constant 0 : index
    %c0_6 = arith.constant 0 : index
    %3 = vector.load %arg7[%c0_5, %c0_6] : memref<8x32xbf16, #tpu.memory_space<vmem>>, vector<8x32xbf16>
    %c0_7 = arith.constant 0 : index
    %c0_8 = arith.constant 0 : index
    %4 = vector.load %arg8[%c0_7, %c0_8] : memref<1x32xf32, #tpu.memory_space<vmem>>, vector<1x32xf32>
    %5 = vector.shape_cast %4 : vector<1x32xf32> to vector<1x32xf32>
    %6 = vector.broadcast %5 : vector<1x32xf32> to vector<8x32xf32>
    %c0_9 = arith.constant 0 : index
    %c0_10 = arith.constant 0 : index
    %7 = vector.load %arg1[%c0_9, %c0_10] : memref<8x8xf32, #tpu.memory_space<vmem>>, vector<8x8xf32>
    %c0_11 = arith.constant 0 : index
    %c0_12 = arith.constant 0 : index
    %8 = vector.load %arg0[%c0_11, %c0_12] : memref<64x16xbf16, #tpu.memory_space<vmem>>, vector<64x16xbf16>
    %cst = arith.constant dense<0.000000e+00> : vector<64x128xf32>
    %9 = tpu.matmul %8, %0, %cst {dimension_numbers = #tpu.dot_dimension_numbers<[1], [0], [0], [1], [0, 0, 1, 1], [], []>} : vector<64x16xbf16>, vector<16x128xbf16>, vector<64x128xf32> -> vector<64x128xf32>
    %10 = vector.broadcast %2 : vector<1x128xf32> to vector<64x128xf32>
    %11 = arith.addf %9, %10 : vector<64x128xf32>
    %12 = vector.shape_cast %11 : vector<64x128xf32> to vector<8x8x128xf32>
    %c0_13 = arith.constant 0 : index
    %c0_14 = arith.constant 0 : index
    %c0_15 = arith.constant 0 : index
    %13 = vector.load %arg12[%c0_13, %c0_14, %c0_15] : memref<8x8x128xf32, #tpu.memory_space<vmem>>, vector<8x8x128xf32>
    tpu.vector_store %arg12[%c0_13, %c0_14, %c0_15], %12 {strides = array<i32>} : memref<8x8x128xf32, #tpu.memory_space<vmem>>, vector<8x8x128xf32>,
    %c0_16 = arith.constant 0 : index
    %c0_17 = arith.constant 0 : index
    %14 = vector.load %arg2[%c0_16, %c0_17] : memref<8x32xf32, #tpu.memory_space<vmem>>, vector<8x32xf32>
    %c0_18 = arith.constant 0 : index
    %c0_19 = arith.constant 0 : index
    %15 = vector.load %arg3[%c0_18, %c0_19] : memref<8x32xf32, #tpu.memory_space<vmem>>, vector<8x32xf32>
    %cst_20 = arith.constant 0.000000e+00 : f32
    %16 = vector.broadcast %cst_20 : f32 to vector<8x8xf32>
    %c0_i32 = arith.constant 0 : i32
    %17 = arith.subf %7, %16 : vector<8x8xf32>
    %18 = arith.truncf %17 : vector<8x8xf32> to vector<8x8xbf16>
    %cst_21 = arith.constant dense<0.000000e+00> : vector<8x32xf32>
    %19 = tpu.matmul %18, %3, %cst_21 {dimension_numbers = #tpu.dot_dimension_numbers<[1], [0], [0], [1], [0, 0, 1, 1], [], []>} : vector<8x8xbf16>, vector<8x32xbf16>, vector<8x32xf32> -> vector<8x32xf32>
    %20 = arith.addf %19, %6 : vector<8x32xf32>
    %21 = arith.index_cast %c0_i32 : i32 to index
    %c0_22 = arith.constant 0 : index
    %c0_23 = arith.constant 0 : index
    %22 = vector.load %arg12[%21, %c0_22, %c0_23] : memref<8x8x128xf32, #tpu.memory_space<vmem>>, vector<1x8x128xf32>
    %23 = vector.shape_cast %22 : vector<1x8x128xf32> to vector<8x128xf32>
    %24 = arith.truncf %14 : vector<8x32xf32> to vector<8x32xbf16>
    %cst_24 = arith.constant dense<0.000000e+00> : vector<8x128xf32>
    %25 = tpu.matmul %24, %1, %cst_24 {dimension_numbers = #tpu.dot_dimension_numbers<[1], [0], [0], [1], [0, 0, 1, 1], [], []>} : vector<8x32xbf16>, vector<32x128xbf16>, vector<8x128xf32> -> vector<8x128xf32>
    %26 = arith.addf %23, %25 : vector<8x128xf32>
    %27 = vector.extract_strided_slice %26 {offsets = [0, 0], sizes = [8, 32], strides = [1, 1]} : vector<8x128xf32> to vector<8x32xf32>
    %28 = arith.negf %27 : vector<8x32xf32>
    %29 = math.exp %28 : vector<8x32xf32>
    %cst_25 = arith.constant 1.000000e+00 : f32
    %30 = vector.broadcast %cst_25 : f32 to vector<8x32xf32>
    %31 = arith.addf %30, %29 : vector<8x32xf32>
    %32 = arith.divf %30, %31 : vector<8x32xf32>
    %33 = vector.extract_strided_slice %26 {offsets = [0, 32], sizes = [8, 32], strides = [1, 1]} : vector<8x128xf32> to vector<8x32xf32>
    %34 = arith.negf %33 : vector<8x32xf32>
    %35 = math.exp %34 : vector<8x32xf32>
    %cst_26 = arith.constant 1.000000e+00 : f32
    %36 = vector.broadcast %cst_26 : f32 to vector<8x32xf32>
    %37 = arith.addf %36, %35 : vector<8x32xf32>
    %38 = arith.divf %36, %37 : vector<8x32xf32>
    %39 = arith.mulf %38, %20 : vector<8x32xf32>
    %40 = vector.extract_strided_slice %26 {offsets = [0, 64], sizes = [8, 32], strides = [1, 1]} : vector<8x128xf32> to vector<8x32xf32>
    %41 = math.tanh %40 : vector<8x32xf32>
    %cst_27 = arith.constant 1.000000e+00 : f32
    %42 = vector.broadcast %cst_27 : f32 to vector<8x32xf32>
    %43 = arith.subf %42, %20 : vector<8x32xf32>
    %44 = arith.mulf %41, %43 : vector<8x32xf32>
    %45 = vector.extract_strided_slice %26 {offsets = [0, 96], sizes = [8, 32], strides = [1, 1]} : vector<8x128xf32> to vector<8x32xf32>
    %46 = arith.negf %45 : vector<8x32xf32>
    %47 = math.exp %46 : vector<8x32xf32>
    %cst_28 = arith.constant 1.000000e+00 : f32
    %48 = vector.broadcast %cst_28 : f32 to vector<8x32xf32>
    %49 = arith.addf %48, %47 : vector<8x32xf32>
    %50 = arith.divf %48, %49 : vector<8x32xf32>
    %51 = arith.mulf %39, %15 : vector<8x32xf32>
    %52 = arith.mulf %32, %44 : vector<8x32xf32>
    %53 = arith.addf %51, %52 : vector<8x32xf32>
    %54 = math.tanh %53 : vector<8x32xf32>
    %55 = arith.mulf %50, %54 : vector<8x32xf32>
    %56 = arith.index_cast %c0_i32 : i32 to index
    %c0_29 = arith.constant 0 : index
    %c0_30 = arith.constant 0 : index
    %57 = vector.load %arg9[%56, %c0_29, %c0_30] : memref<8x8x32xf32, #tpu.memory_space<vmem>>, vector<1x8x32xf32>
    %58 = vector.shape_cast %57 : vector<1x8x32xf32> to vector<8x32xf32>
    %59 = vector.shape_cast %55 : vector<8x32xf32> to vector<1x8x32xf32>
    tpu.vector_store %arg9[%56, %c0_29, %c0_30], %59 {strides = array<i32>} : memref<8x8x32xf32, #tpu.memory_space<vmem>>, vector<1x8x32xf32>,
    %c1_i32 = arith.constant 1 : i32
    %60 = arith.subf %7, %17 : vector<8x8xf32>
    %61 = arith.truncf %60 : vector<8x8xf32> to vector<8x8xbf16>
    %cst_31 = arith.constant dense<0.000000e+00> : vector<8x32xf32>
    %62 = tpu.matmul %61, %3, %cst_31 {dimension_numbers = #tpu.dot_dimension_numbers<[1], [0], [0], [1], [0, 0, 1, 1], [], []>} : vector<8x8xbf16>, vector<8x32xbf16>, vector<8x32xf32> -> vector<8x32xf32>
    %63 = arith.addf %62, %6 : vector<8x32xf32>
    %64 = arith.index_cast %c1_i32 : i32 to index
    %c0_32 = arith.constant 0 : index
    %c0_33 = arith.constant 0 : index
    %65 = vector.load %arg12[%64, %c0_32, %c0_33] : memref<8x8x128xf32, #tpu.memory_space<vmem>>, vector<1x8x128xf32>
    %66 = vector.shape_cast %65 : vector<1x8x128xf32> to vector<8x128xf32>
    %67 = arith.truncf %55 : vector<8x32xf32> to vector<8x32xbf16>
    %cst_34 = arith.constant dense<0.000000e+00> : vector<8x128xf32>
    %68 = tpu.matmul %67, %1, %cst_34 {dimension_numbers = #tpu.dot_dimension_numbers<[1], [0], [0], [1], [0, 0, 1, 1], [], []>} : vector<8x32xbf16>, vector<32x128xbf16>, vector<8x128xf32> -> vector<8x128xf32>
    %69 = arith.addf %66, %68 : vector<8x128xf32>
    %70 = vector.extract_strided_slice %69 {offsets = [0, 0], sizes = [8, 32], strides = [1, 1]} : vector<8x128xf32> to vector<8x32xf32>
    %71 = arith.negf %70 : vector<8x32xf32>
    %72 = math.exp %71 : vector<8x32xf32>
    %cst_35 = arith.constant 1.000000e+00 : f32
    %73 = vector.broadcast %cst_35 : f32 to vector<8x32xf32>
    %74 = arith.addf %73, %72 : vector<8x32xf32>
    %75 = arith.divf %73, %74 : vector<8x32xf32>
    %76 = vector.extract_strided_slice %69 {offsets = [0, 32], sizes = [8, 32], strides = [1, 1]} : vector<8x128xf32> to vector<8x32xf32>
    %77 = arith.negf %76 : vector<8x32xf32>
    %78 = math.exp %77 : vector<8x32xf32>
    %cst_36 = arith.constant 1.000000e+00 : f32
    %79 = vector.broadcast %cst_36 : f32 to vector<8x32xf32>
    %80 = arith.addf %79, %78 : vector<8x32xf32>
    %81 = arith.divf %79, %80 : vector<8x32xf32>
    %82 = arith.mulf %81, %63 : vector<8x32xf32>
    %83 = vector.extract_strided_slice %69 {offsets = [0, 64], sizes = [8, 32], strides = [1, 1]} : vector<8x128xf32> to vector<8x32xf32>
    %84 = math.tanh %83 : vector<8x32xf32>
    %cst_37 = arith.constant 1.000000e+00 : f32
    %85 = vector.broadcast %cst_37 : f32 to vector<8x32xf32>
    %86 = arith.subf %85, %63 : vector<8x32xf32>
    %87 = arith.mulf %84, %86 : vector<8x32xf32>
    %88 = vector.extract_strided_slice %69 {offsets = [0, 96], sizes = [8, 32], strides = [1, 1]} : vector<8x128xf32> to vector<8x32xf32>
    %89 = arith.negf %88 : vector<8x32xf32>
    %90 = math.exp %89 : vector<8x32xf32>
    %cst_38 = arith.constant 1.000000e+00 : f32
    %91 = vector.broadcast %cst_38 : f32 to vector<8x32xf32>
    %92 = arith.addf %91, %90 : vector<8x32xf32>
    %93 = arith.divf %91, %92 : vector<8x32xf32>
    %94 = arith.mulf %82, %53 : vector<8x32xf32>
    %95 = arith.mulf %75, %87 : vector<8x32xf32>
    %96 = arith.addf %94, %95 : vector<8x32xf32>
    %97 = math.tanh %96 : vector<8x32xf32>
    %98 = arith.mulf %93, %97 : vector<8x32xf32>
    %99 = arith.index_cast %c1_i32 : i32 to index
    %c0_39 = arith.constant 0 : index
    %c0_40 = arith.constant 0 : index
    %100 = vector.load %arg9[%99, %c0_39, %c0_40] : memref<8x8x32xf32, #tpu.memory_space<vmem>>, vector<1x8x32xf32>
    %101 = vector.shape_cast %100 : vector<1x8x32xf32> to vector<8x32xf32>
    %102 = vector.shape_cast %98 : vector<8x32xf32> to vector<1x8x32xf32>
    tpu.vector_store %arg9[%99, %c0_39, %c0_40], %102 {strides = array<i32>} : memref<8x8x32xf32, #tpu.memory_space<vmem>>, vector<1x8x32xf32>,
    %c2_i32 = arith.constant 2 : i32
    %103 = arith.subf %7, %60 : vector<8x8xf32>
    %104 = arith.truncf %103 : vector<8x8xf32> to vector<8x8xbf16>
    %cst_41 = arith.constant dense<0.000000e+00> : vector<8x32xf32>
    %105 = tpu.matmul %104, %3, %cst_41 {dimension_numbers = #tpu.dot_dimension_numbers<[1], [0], [0], [1], [0, 0, 1, 1], [], []>} : vector<8x8xbf16>, vector<8x32xbf16>, vector<8x32xf32> -> vector<8x32xf32>
    %106 = arith.addf %105, %6 : vector<8x32xf32>
    %107 = arith.index_cast %c2_i32 : i32 to index
    %c0_42 = arith.constant 0 : index
    %c0_43 = arith.constant 0 : index
    %108 = vector.load %arg12[%107, %c0_42, %c0_43] : memref<8x8x128xf32, #tpu.memory_space<vmem>>, vector<1x8x128xf32>
    %109 = vector.shape_cast %108 : vector<1x8x128xf32> to vector<8x128xf32>
    %110 = arith.truncf %98 : vector<8x32xf32> to vector<8x32xbf16>
    %cst_44 = arith.constant dense<0.000000e+00> : vector<8x128xf32>
    %111 = tpu.matmul %110, %1, %cst_44 {dimension_numbers = #tpu.dot_dimension_numbers<[1], [0], [0], [1], [0, 0, 1, 1], [], []>} : vector<8x32xbf16>, vector<32x128xbf16>, vector<8x128xf32> -> vector<8x128xf32>
    %112 = arith.addf %109, %111 : vector<8x128xf32>
    %113 = vector.extract_strided_slice %112 {offsets = [0, 0], sizes = [8, 32], strides = [1, 1]} : vector<8x128xf32> to vector<8x32xf32>
    %114 = arith.negf %113 : vector<8x32xf32>
    %115 = math.exp %114 : vector<8x32xf32>
    %cst_45 = arith.constant 1.000000e+00 : f32
    %116 = vector.broadcast %cst_45 : f32 to vector<8x32xf32>
    %117 = arith.addf %116, %115 : vector<8x32xf32>
    %118 = arith.divf %116, %117 : vector<8x32xf32>
    %119 = vector.extract_strided_slice %112 {offsets = [0, 32], sizes = [8, 32], strides = [1, 1]} : vector<8x128xf32> to vector<8x32xf32>
    %120 = arith.negf %119 : vector<8x32xf32>
    %121 = math.exp %120 : vector<8x32xf32>
    %cst_46 = arith.constant 1.000000e+00 : f32
    %122 = vector.broadcast %cst_46 : f32 to vector<8x32xf32>
    %123 = arith.addf %122, %121 : vector<8x32xf32>
    %124 = arith.divf %122, %123 : vector<8x32xf32>
    %125 = arith.mulf %124, %106 : vector<8x32xf32>
    %126 = vector.extract_strided_slice %112 {offsets = [0, 64], sizes = [8, 32], strides = [1, 1]} : vector<8x128xf32> to vector<8x32xf32>
    %127 = math.tanh %126 : vector<8x32xf32>
    %cst_47 = arith.constant 1.000000e+00 : f32
    %128 = vector.broadcast %cst_47 : f32 to vector<8x32xf32>
    %129 = arith.subf %128, %106 : vector<8x32xf32>
    %130 = arith.mulf %127, %129 : vector<8x32xf32>
    %131 = vector.extract_strided_slice %112 {offsets = [0, 96], sizes = [8, 32], strides = [1, 1]} : vector<8x128xf32> to vector<8x32xf32>
    %132 = arith.negf %131 : vector<8x32xf32>
    %133 = math.exp %132 : vector<8x32xf32>
    %cst_48 = arith.constant 1.000000e+00 : f32
    %134 = vector.broadcast %cst_48 : f32 to vector<8x32xf32>
    %135 = arith.addf %134, %133 : vector<8x32xf32>
    %136 = arith.divf %134, %135 : vector<8x32xf32>
    %137 = arith.mulf %125, %96 : vector<8x32xf32>
    %138 = arith.mulf %118, %130 : vector<8x32xf32>
    %139 = arith.addf %137, %138 : vector<8x32xf32>
    %140 = math.tanh %139 : vector<8x32xf32>
    %141 = arith.mulf %136, %140 : vector<8x32xf32>
    %142 = arith.index_cast %c2_i32 : i32 to index
    %c0_49 = arith.constant 0 : index
    %c0_50 = arith.constant 0 : index
    %143 = vector.load %arg9[%142, %c0_49, %c0_50] : memref<8x8x32xf32, #tpu.memory_space<vmem>>, vector<1x8x32xf32>
    %144 = vector.shape_cast %143 : vector<1x8x32xf32> to vector<8x32xf32>
    %145 = vector.shape_cast %141 : vector<8x32xf32> to vector<1x8x32xf32>
    tpu.vector_store %arg9[%142, %c0_49, %c0_50], %145 {strides = array<i32>} : memref<8x8x32xf32, #tpu.memory_space<vmem>>, vector<1x8x32xf32>,
    %c3_i32 = arith.constant 3 : i32
    %146 = arith.subf %7, %103 : vector<8x8xf32>
    %147 = arith.truncf %146 : vector<8x8xf32> to vector<8x8xbf16>
    %cst_51 = arith.constant dense<0.000000e+00> : vector<8x32xf32>
    %148 = tpu.matmul %147, %3, %cst_51 {dimension_numbers = #tpu.dot_dimension_numbers<[1], [0], [0], [1], [0, 0, 1, 1], [], []>} : vector<8x8xbf16>, vector<8x32xbf16>, vector<8x32xf32> -> vector<8x32xf32>
    %149 = arith.addf %148, %6 : vector<8x32xf32>
    %150 = arith.index_cast %c3_i32 : i32 to index
    %c0_52 = arith.constant 0 : index
    %c0_53 = arith.constant 0 : index
    %151 = vector.load %arg12[%150, %c0_52, %c0_53] : memref<8x8x128xf32, #tpu.memory_space<vmem>>, vector<1x8x128xf32>
    %152 = vector.shape_cast %151 : vector<1x8x128xf32> to vector<8x128xf32>
    %153 = arith.truncf %141 : vector<8x32xf32> to vector<8x32xbf16>
    %cst_54 = arith.constant dense<0.000000e+00> : vector<8x128xf32>
    %154 = tpu.matmul %153, %1, %cst_54 {dimension_numbers = #tpu.dot_dimension_numbers<[1], [0], [0], [1], [0, 0, 1, 1], [], []>} : vector<8x32xbf16>, vector<32x128xbf16>, vector<8x128xf32> -> vector<8x128xf32>
    %155 = arith.addf %152, %154 : vector<8x128xf32>
    %156 = vector.extract_strided_slice %155 {offsets = [0, 0], sizes = [8, 32], strides = [1, 1]} : vector<8x128xf32> to vector<8x32xf32>
    %157 = arith.negf %156 : vector<8x32xf32>
    %158 = math.exp %157 : vector<8x32xf32>
    %cst_55 = arith.constant 1.000000e+00 : f32
    %159 = vector.broadcast %cst_55 : f32 to vector<8x32xf32>
    %160 = arith.addf %159, %158 : vector<8x32xf32>
    %161 = arith.divf %159, %160 : vector<8x32xf32>
    %162 = vector.extract_strided_slice %155 {offsets = [0, 32], sizes = [8, 32], strides = [1, 1]} : vector<8x128xf32> to vector<8x32xf32>
    %163 = arith.negf %162 : vector<8x32xf32>
    %164 = math.exp %163 : vector<8x32xf32>
    %cst_56 = arith.constant 1.000000e+00 : f32
    %165 = vector.broadcast %cst_56 : f32 to vector<8x32xf32>
    %166 = arith.addf %165, %164 : vector<8x32xf32>
    %167 = arith.divf %165, %166 : vector<8x32xf32>
    %168 = arith.mulf %167, %149 : vector<8x32xf32>
    %169 = vector.extract_strided_slice %155 {offsets = [0, 64], sizes = [8, 32], strides = [1, 1]} : vector<8x128xf32> to vector<8x32xf32>
    %170 = math.tanh %169 : vector<8x32xf32>
    %cst_57 = arith.constant 1.000000e+00 : f32
    %171 = vector.broadcast %cst_57 : f32 to vector<8x32xf32>
    %172 = arith.subf %171, %149 : vector<8x32xf32>
    %173 = arith.mulf %170, %172 : vector<8x32xf32>
    %174 = vector.extract_strided_slice %155 {offsets = [0, 96], sizes = [8, 32], strides = [1, 1]} : vector<8x128xf32> to vector<8x32xf32>
    %175 = arith.negf %174 : vector<8x32xf32>
    %176 = math.exp %175 : vector<8x32xf32>
    %cst_58 = arith.constant 1.000000e+00 : f32
    %177 = vector.broadcast %cst_58 : f32 to vector<8x32xf32>
    %178 = arith.addf %177, %176 : vector<8x32xf32>
    %179 = arith.divf %177, %178 : vector<8x32xf32>
    %180 = arith.mulf %168, %139 : vector<8x32xf32>
    %181 = arith.mulf %161, %173 : vector<8x32xf32>
    %182 = arith.addf %180, %181 : vector<8x32xf32>
    %183 = math.tanh %182 : vector<8x32xf32>
    %184 = arith.mulf %179, %183 : vector<8x32xf32>
    %185 = arith.index_cast %c3_i32 : i32 to index
    %c0_59 = arith.constant 0 : index
    %c0_60 = arith.constant 0 : index
    %186 = vector.load %arg9[%185, %c0_59, %c0_60] : memref<8x8x32xf32, #tpu.memory_space<vmem>>, vector<1x8x32xf32>
    %187 = vector.shape_cast %186 : vector<1x8x32xf32> to vector<8x32xf32>
    %188 = vector.shape_cast %184 : vector<8x32xf32> to vector<1x8x32xf32>
    tpu.vector_store %arg9[%185, %c0_59, %c0_60], %188 {strides = array<i32>} : memref<8x8x32xf32, #tpu.memory_space<vmem>>, vector<1x8x32xf32>,
    %c4_i32 = arith.constant 4 : i32
    %189 = arith.subf %7, %146 : vector<8x8xf32>
    %190 = arith.truncf %189 : vector<8x8xf32> to vector<8x8xbf16>
    %cst_61 = arith.constant dense<0.000000e+00> : vector<8x32xf32>
    %191 = tpu.matmul %190, %3, %cst_61 {dimension_numbers = #tpu.dot_dimension_numbers<[1], [0], [0], [1], [0, 0, 1, 1], [], []>} : vector<8x8xbf16>, vector<8x32xbf16>, vector<8x32xf32> -> vector<8x32xf32>
    %192 = arith.addf %191, %6 : vector<8x32xf32>
    %193 = arith.index_cast %c4_i32 : i32 to index
    %c0_62 = arith.constant 0 : index
    %c0_63 = arith.constant 0 : index
    %194 = vector.load %arg12[%193, %c0_62, %c0_63] : memref<8x8x128xf32, #tpu.memory_space<vmem>>, vector<1x8x128xf32>
    %195 = vector.shape_cast %194 : vector<1x8x128xf32> to vector<8x128xf32>
    %196 = arith.truncf %184 : vector<8x32xf32> to vector<8x32xbf16>
    %cst_64 = arith.constant dense<0.000000e+00> : vector<8x128xf32>
    %197 = tpu.matmul %196, %1, %cst_64 {dimension_numbers = #tpu.dot_dimension_numbers<[1], [0], [0], [1], [0, 0, 1, 1], [], []>} : vector<8x32xbf16>, vector<32x128xbf16>, vector<8x128xf32> -> vector<8x128xf32>
    %198 = arith.addf %195, %197 : vector<8x128xf32>
    %199 = vector.extract_strided_slice %198 {offsets = [0, 0], sizes = [8, 32], strides = [1, 1]} : vector<8x128xf32> to vector<8x32xf32>
    %200 = arith.negf %199 : vector<8x32xf32>
    %201 = math.exp %200 : vector<8x32xf32>
    %cst_65 = arith.constant 1.000000e+00 : f32
    %202 = vector.broadcast %cst_65 : f32 to vector<8x32xf32>
    %203 = arith.addf %202, %201 : vector<8x32xf32>
    %204 = arith.divf %202, %203 : vector<8x32xf32>
    %205 = vector.extract_strided_slice %198 {offsets = [0, 32], sizes = [8, 32], strides = [1, 1]} : vector<8x128xf32> to vector<8x32xf32>
    %206 = arith.negf %205 : vector<8x32xf32>
    %207 = math.exp %206 : vector<8x32xf32>
    %cst_66 = arith.constant 1.000000e+00 : f32
    %208 = vector.broadcast %cst_66 : f32 to vector<8x32xf32>
    %209 = arith.addf %208, %207 : vector<8x32xf32>
    %210 = arith.divf %208, %209 : vector<8x32xf32>
    %211 = arith.mulf %210, %192 : vector<8x32xf32>
    %212 = vector.extract_strided_slice %198 {offsets = [0, 64], sizes = [8, 32], strides = [1, 1]} : vector<8x128xf32> to vector<8x32xf32>
    %213 = math.tanh %212 : vector<8x32xf32>
    %cst_67 = arith.constant 1.000000e+00 : f32
    %214 = vector.broadcast %cst_67 : f32 to vector<8x32xf32>
    %215 = arith.subf %214, %192 : vector<8x32xf32>
    %216 = arith.mulf %213, %215 : vector<8x32xf32>
    %217 = vector.extract_strided_slice %198 {offsets = [0, 96], sizes = [8, 32], strides = [1, 1]} : vector<8x128xf32> to vector<8x32xf32>
    %218 = arith.negf %217 : vector<8x32xf32>
    %219 = math.exp %218 : vector<8x32xf32>
    %cst_68 = arith.constant 1.000000e+00 : f32
    %220 = vector.broadcast %cst_68 : f32 to vector<8x32xf32>
    %221 = arith.addf %220, %219 : vector<8x32xf32>
    %222 = arith.divf %220, %221 : vector<8x32xf32>
    %223 = arith.mulf %211, %182 : vector<8x32xf32>
    %224 = arith.mulf %204, %216 : vector<8x32xf32>
    %225 = arith.addf %223, %224 : vector<8x32xf32>
    %226 = math.tanh %225 : vector<8x32xf32>
    %227 = arith.mulf %222, %226 : vector<8x32xf32>
    %228 = arith.index_cast %c4_i32 : i32 to index
    %c0_69 = arith.constant 0 : index
    %c0_70 = arith.constant 0 : index
    %229 = vector.load %arg9[%228, %c0_69, %c0_70] : memref<8x8x32xf32, #tpu.memory_space<vmem>>, vector<1x8x32xf32>
    %230 = vector.shape_cast %229 : vector<1x8x32xf32> to vector<8x32xf32>
    %231 = vector.shape_cast %227 : vector<8x32xf32> to vector<1x8x32xf32>
    tpu.vector_store %arg9[%228, %c0_69, %c0_70], %231 {strides = array<i32>} : memref<8x8x32xf32, #tpu.memory_space<vmem>>, vector<1x8x32xf32>,
    %c5_i32 = arith.constant 5 : i32
    %232 = arith.subf %7, %189 : vector<8x8xf32>
    %233 = arith.truncf %232 : vector<8x8xf32> to vector<8x8xbf16>
    %cst_71 = arith.constant dense<0.000000e+00> : vector<8x32xf32>
    %234 = tpu.matmul %233, %3, %cst_71 {dimension_numbers = #tpu.dot_dimension_numbers<[1], [0], [0], [1], [0, 0, 1, 1], [], []>} : vector<8x8xbf16>, vector<8x32xbf16>, vector<8x32xf32> -> vector<8x32xf32>
    %235 = arith.addf %234, %6 : vector<8x32xf32>
    %236 = arith.index_cast %c5_i32 : i32 to index
    %c0_72 = arith.constant 0 : index
    %c0_73 = arith.constant 0 : index
    %237 = vector.load %arg12[%236, %c0_72, %c0_73] : memref<8x8x128xf32, #tpu.memory_space<vmem>>, vector<1x8x128xf32>
    %238 = vector.shape_cast %237 : vector<1x8x128xf32> to vector<8x128xf32>
    %239 = arith.truncf %227 : vector<8x32xf32> to vector<8x32xbf16>
    %cst_74 = arith.constant dense<0.000000e+00> : vector<8x128xf32>
    %240 = tpu.matmul %239, %1, %cst_74 {dimension_numbers = #tpu.dot_dimension_numbers<[1], [0], [0], [1], [0, 0, 1, 1], [], []>} : vector<8x32xbf16>, vector<32x128xbf16>, vector<8x128xf32> -> vector<8x128xf32>
    %241 = arith.addf %238, %240 : vector<8x128xf32>
    %242 = vector.extract_strided_slice %241 {offsets = [0, 0], sizes = [8, 32], strides = [1, 1]} : vector<8x128xf32> to vector<8x32xf32>
    %243 = arith.negf %242 : vector<8x32xf32>
    %244 = math.exp %243 : vector<8x32xf32>
    %cst_75 = arith.constant 1.000000e+00 : f32
    %245 = vector.broadcast %cst_75 : f32 to vector<8x32xf32>
    %246 = arith.addf %245, %244 : vector<8x32xf32>
    %247 = arith.divf %245, %246 : vector<8x32xf32>
    %248 = vector.extract_strided_slice %241 {offsets = [0, 32], sizes = [8, 32], strides = [1, 1]} : vector<8x128xf32> to vector<8x32xf32>
    %249 = arith.negf %248 : vector<8x32xf32>
    %250 = math.exp %249 : vector<8x32xf32>
    %cst_76 = arith.constant 1.000000e+00 : f32
    %251 = vector.broadcast %cst_76 : f32 to vector<8x32xf32>
    %252 = arith.addf %251, %250 : vector<8x32xf32>
    %253 = arith.divf %251, %252 : vector<8x32xf32>
    %254 = arith.mulf %253, %235 : vector<8x32xf32>
    %255 = vector.extract_strided_slice %241 {offsets = [0, 64], sizes = [8, 32], strides = [1, 1]} : vector<8x128xf32> to vector<8x32xf32>
    %256 = math.tanh %255 : vector<8x32xf32>
    %cst_77 = arith.constant 1.000000e+00 : f32
    %257 = vector.broadcast %cst_77 : f32 to vector<8x32xf32>
    %258 = arith.subf %257, %235 : vector<8x32xf32>
    %259 = arith.mulf %256, %258 : vector<8x32xf32>
    %260 = vector.extract_strided_slice %241 {offsets = [0, 96], sizes = [8, 32], strides = [1, 1]} : vector<8x128xf32> to vector<8x32xf32>
    %261 = arith.negf %260 : vector<8x32xf32>
    %262 = math.exp %261 : vector<8x32xf32>
    %cst_78 = arith.constant 1.000000e+00 : f32
    %263 = vector.broadcast %cst_78 : f32 to vector<8x32xf32>
    %264 = arith.addf %263, %262 : vector<8x32xf32>
    %265 = arith.divf %263, %264 : vector<8x32xf32>
    %266 = arith.mulf %254, %225 : vector<8x32xf32>
    %267 = arith.mulf %247, %259 : vector<8x32xf32>
    %268 = arith.addf %266, %267 : vector<8x32xf32>
    %269 = math.tanh %268 : vector<8x32xf32>
    %270 = arith.mulf %265, %269 : vector<8x32xf32>
    %271 = arith.index_cast %c5_i32 : i32 to index
    %c0_79 = arith.constant 0 : index
    %c0_80 = arith.constant 0 : index
    %272 = vector.load %arg9[%271, %c0_79, %c0_80] : memref<8x8x32xf32, #tpu.memory_space<vmem>>, vector<1x8x32xf32>
    %273 = vector.shape_cast %272 : vector<1x8x32xf32> to vector<8x32xf32>
    %274 = vector.shape_cast %270 : vector<8x32xf32> to vector<1x8x32xf32>
    tpu.vector_store %arg9[%271, %c0_79, %c0_80], %274 {strides = array<i32>} : memref<8x8x32xf32, #tpu.memory_space<vmem>>, vector<1x8x32xf32>,
    %c6_i32 = arith.constant 6 : i32
    %275 = arith.subf %7, %232 : vector<8x8xf32>
    %276 = arith.truncf %275 : vector<8x8xf32> to vector<8x8xbf16>
    %cst_81 = arith.constant dense<0.000000e+00> : vector<8x32xf32>
    %277 = tpu.matmul %276, %3, %cst_81 {dimension_numbers = #tpu.dot_dimension_numbers<[1], [0], [0], [1], [0, 0, 1, 1], [], []>} : vector<8x8xbf16>, vector<8x32xbf16>, vector<8x32xf32> -> vector<8x32xf32>
    %278 = arith.addf %277, %6 : vector<8x32xf32>
    %279 = arith.index_cast %c6_i32 : i32 to index
    %c0_82 = arith.constant 0 : index
    %c0_83 = arith.constant 0 : index
    %280 = vector.load %arg12[%279, %c0_82, %c0_83] : memref<8x8x128xf32, #tpu.memory_space<vmem>>, vector<1x8x128xf32>
    %281 = vector.shape_cast %280 : vector<1x8x128xf32> to vector<8x128xf32>
    %282 = arith.truncf %270 : vector<8x32xf32> to vector<8x32xbf16>
    %cst_84 = arith.constant dense<0.000000e+00> : vector<8x128xf32>
    %283 = tpu.matmul %282, %1, %cst_84 {dimension_numbers = #tpu.dot_dimension_numbers<[1], [0], [0], [1], [0, 0, 1, 1], [], []>} : vector<8x32xbf16>, vector<32x128xbf16>, vector<8x128xf32> -> vector<8x128xf32>
    %284 = arith.addf %281, %283 : vector<8x128xf32>
    %285 = vector.extract_strided_slice %284 {offsets = [0, 0], sizes = [8, 32], strides = [1, 1]} : vector<8x128xf32> to vector<8x32xf32>
    %286 = arith.negf %285 : vector<8x32xf32>
    %287 = math.exp %286 : vector<8x32xf32>
    %cst_85 = arith.constant 1.000000e+00 : f32
    %288 = vector.broadcast %cst_85 : f32 to vector<8x32xf32>
    %289 = arith.addf %288, %287 : vector<8x32xf32>
    %290 = arith.divf %288, %289 : vector<8x32xf32>
    %291 = vector.extract_strided_slice %284 {offsets = [0, 32], sizes = [8, 32], strides = [1, 1]} : vector<8x128xf32> to vector<8x32xf32>
    %292 = arith.negf %291 : vector<8x32xf32>
    %293 = math.exp %292 : vector<8x32xf32>
    %cst_86 = arith.constant 1.000000e+00 : f32
    %294 = vector.broadcast %cst_86 : f32 to vector<8x32xf32>
    %295 = arith.addf %294, %293 : vector<8x32xf32>
    %296 = arith.divf %294, %295 : vector<8x32xf32>
    %297 = arith.mulf %296, %278 : vector<8x32xf32>
    %298 = vector.extract_strided_slice %284 {offsets = [0, 64], sizes = [8, 32], strides = [1, 1]} : vector<8x128xf32> to vector<8x32xf32>
    %299 = math.tanh %298 : vector<8x32xf32>
    %cst_87 = arith.constant 1.000000e+00 : f32
    %300 = vector.broadcast %cst_87 : f32 to vector<8x32xf32>
    %301 = arith.subf %300, %278 : vector<8x32xf32>
    %302 = arith.mulf %299, %301 : vector<8x32xf32>
    %303 = vector.extract_strided_slice %284 {offsets = [0, 96], sizes = [8, 32], strides = [1, 1]} : vector<8x128xf32> to vector<8x32xf32>
    %304 = arith.negf %303 : vector<8x32xf32>
    %305 = math.exp %304 : vector<8x32xf32>
    %cst_88 = arith.constant 1.000000e+00 : f32
    %306 = vector.broadcast %cst_88 : f32 to vector<8x32xf32>
    %307 = arith.addf %306, %305 : vector<8x32xf32>
    %308 = arith.divf %306, %307 : vector<8x32xf32>
    %309 = arith.mulf %297, %268 : vector<8x32xf32>
    %310 = arith.mulf %290, %302 : vector<8x32xf32>
    %311 = arith.addf %309, %310 : vector<8x32xf32>
    %312 = math.tanh %311 : vector<8x32xf32>
    %313 = arith.mulf %308, %312 : vector<8x32xf32>
    %314 = arith.index_cast %c6_i32 : i32 to index
    %c0_89 = arith.constant 0 : index
    %c0_90 = arith.constant 0 : index
    %315 = vector.load %arg9[%314, %c0_89, %c0_90] : memref<8x8x32xf32, #tpu.memory_space<vmem>>, vector<1x8x32xf32>
    %316 = vector.shape_cast %315 : vector<1x8x32xf32> to vector<8x32xf32>
    %317 = vector.shape_cast %313 : vector<8x32xf32> to vector<1x8x32xf32>
    tpu.vector_store %arg9[%314, %c0_89, %c0_90], %317 {strides = array<i32>} : memref<8x8x32xf32, #tpu.memory_space<vmem>>, vector<1x8x32xf32>,
    %c7_i32 = arith.constant 7 : i32
    %318 = arith.subf %7, %275 : vector<8x8xf32>
    %319 = arith.truncf %318 : vector<8x8xf32> to vector<8x8xbf16>
    %cst_91 = arith.constant dense<0.000000e+00> : vector<8x32xf32>
    %320 = tpu.matmul %319, %3, %cst_91 {dimension_numbers = #tpu.dot_dimension_numbers<[1], [0], [0], [1], [0, 0, 1, 1], [], []>} : vector<8x8xbf16>, vector<8x32xbf16>, vector<8x32xf32> -> vector<8x32xf32>
    %321 = arith.addf %320, %6 : vector<8x32xf32>
    %322 = arith.index_cast %c7_i32 : i32 to index
    %c0_92 = arith.constant 0 : index
    %c0_93 = arith.constant 0 : index
    %323 = vector.load %arg12[%322, %c0_92, %c0_93] : memref<8x8x128xf32, #tpu.memory_space<vmem>>, vector<1x8x128xf32>
    %324 = vector.shape_cast %323 : vector<1x8x128xf32> to vector<8x128xf32>
    %325 = arith.truncf %313 : vector<8x32xf32> to vector<8x32xbf16>
    %cst_94 = arith.constant dense<0.000000e+00> : vector<8x128xf32>
    %326 = tpu.matmul %325, %1, %cst_94 {dimension_numbers = #tpu.dot_dimension_numbers<[1], [0], [0], [1], [0, 0, 1, 1], [], []>} : vector<8x32xbf16>, vector<32x128xbf16>, vector<8x128xf32> -> vector<8x128xf32>
    %327 = arith.addf %324, %326 : vector<8x128xf32>
    %328 = vector.extract_strided_slice %327 {offsets = [0, 0], sizes = [8, 32], strides = [1, 1]} : vector<8x128xf32> to vector<8x32xf32>
    %329 = arith.negf %328 : vector<8x32xf32>
    %330 = math.exp %329 : vector<8x32xf32>
    %cst_95 = arith.constant 1.000000e+00 : f32
    %331 = vector.broadcast %cst_95 : f32 to vector<8x32xf32>
    %332 = arith.addf %331, %330 : vector<8x32xf32>
    %333 = arith.divf %331, %332 : vector<8x32xf32>
    %334 = vector.extract_strided_slice %327 {offsets = [0, 32], sizes = [8, 32], strides = [1, 1]} : vector<8x128xf32> to vector<8x32xf32>
    %335 = arith.negf %334 : vector<8x32xf32>
    %336 = math.exp %335 : vector<8x32xf32>
    %cst_96 = arith.constant 1.000000e+00 : f32
    %337 = vector.broadcast %cst_96 : f32 to vector<8x32xf32>
    %338 = arith.addf %337, %336 : vector<8x32xf32>
    %339 = arith.divf %337, %338 : vector<8x32xf32>
    %340 = arith.mulf %339, %321 : vector<8x32xf32>
    %341 = vector.extract_strided_slice %327 {offsets = [0, 64], sizes = [8, 32], strides = [1, 1]} : vector<8x128xf32> to vector<8x32xf32>
    %342 = math.tanh %341 : vector<8x32xf32>
    %cst_97 = arith.constant 1.000000e+00 : f32
    %343 = vector.broadcast %cst_97 : f32 to vector<8x32xf32>
    %344 = arith.subf %343, %321 : vector<8x32xf32>
    %345 = arith.mulf %342, %344 : vector<8x32xf32>
    %346 = vector.extract_strided_slice %327 {offsets = [0, 96], sizes = [8, 32], strides = [1, 1]} : vector<8x128xf32> to vector<8x32xf32>
    %347 = arith.negf %346 : vector<8x32xf32>
    %348 = math.exp %347 : vector<8x32xf32>
    %cst_98 = arith.constant 1.000000e+00 : f32
    %349 = vector.broadcast %cst_98 : f32 to vector<8x32xf32>
    %350 = arith.addf %349, %348 : vector<8x32xf32>
    %351 = arith.divf %349, %350 : vector<8x32xf32>
    %352 = arith.mulf %340, %311 : vector<8x32xf32>
    %353 = arith.mulf %333, %345 : vector<8x32xf32>
    %354 = arith.addf %352, %353 : vector<8x32xf32>
    %355 = math.tanh %354 : vector<8x32xf32>
    %356 = arith.mulf %351, %355 : vector<8x32xf32>
    %357 = arith.index_cast %c7_i32 : i32 to index
    %c0_99 = arith.constant 0 : index
    %c0_100 = arith.constant 0 : index
    %358 = vector.load %arg9[%357, %c0_99, %c0_100] : memref<8x8x32xf32, #tpu.memory_space<vmem>>, vector<1x8x32xf32>
    %359 = vector.shape_cast %358 : vector<1x8x32xf32> to vector<8x32xf32>
    %360 = vector.shape_cast %356 : vector<8x32xf32> to vector<1x8x32xf32>
    tpu.vector_store %arg9[%357, %c0_99, %c0_100], %360 {strides = array<i32>} : memref<8x8x32xf32, #tpu.memory_space<vmem>>, vector<1x8x32xf32>,
    %c8_i32 = arith.constant 8 : i32
    %c0_101 = arith.constant 0 : index
    %c0_102 = arith.constant 0 : index
    %361 = vector.load %arg10[%c0_101, %c0_102] : memref<8x32xf32, #tpu.memory_space<vmem>>, vector<8x32xf32>
    tpu.vector_store %arg10[%c0_101, %c0_102], %356 {strides = array<i32>} : memref<8x32xf32, #tpu.memory_space<vmem>>, vector<8x32xf32>,
    %c0_103 = arith.constant 0 : index
    %c0_104 = arith.constant 0 : index
    %362 = vector.load %arg11[%c0_103, %c0_104] : memref<8x32xf32, #tpu.memory_space<vmem>>, vector<8x32xf32>
    tpu.vector_store %arg11[%c0_103, %c0_104], %354 {strides = array<i32>} : memref<8x32xf32, #tpu.memory_space<vmem>>, vector<8x32xf32>,
    return
  }
}

</mosaic_0001>

<llo_original>
// kernel: tlstm_forward.1
$region0: #{tlstm_forward.1}
  #allocation0 [shape = 'u32[]', space=smem, size = 0x4, offset = 0x4, fixed_abs, tag = 'smem constant byte address 0x4 - core index']
  #allocation1 [shape = 'u32[144,128]{1,0:T(1,128)}', space=vmem, size = 0x12000, scoped, tag = 'internal scratch']
  #allocation2 [shape = 'f32[8,8,128]{2,1,0:T(8,128)}', space=vmem, size = 0x8000, scoped, tag = 'scratch operand']
  %s0 = inlined_call_operand.vmem [shape: bf16[64,16], index: 0, kind: input, shape index: {}]
  %s1 = inlined_call_operand.vmem [shape: f32[8,8], index: 1, kind: input, shape index: {}]
  %s2 = inlined_call_operand.vmem [shape: f32[8,32], index: 2, kind: input, shape index: {}, may-alias: {2,3}]
  %s3 = inlined_call_operand.vmem [shape: f32[8,32], index: 3, kind: input, shape index: {}, may-alias: {2,3}]
  %s4 = inlined_call_operand.vmem [shape: bf16[16,128], index: 4, kind: input, shape index: {}]
  %s5 = inlined_call_operand.vmem [shape: bf16[32,128], index: 5, kind: input, shape index: {}]
  %s6 = inlined_call_operand.vmem [shape: f32[1,128], index: 6, kind: input, shape index: {}]
  %s7 = inlined_call_operand.vmem [shape: bf16[8,32], index: 7, kind: input, shape index: {}]
  %s8 = inlined_call_operand.vmem [shape: f32[1,32], index: 8, kind: input, shape index: {}]
  %s9 = inlined_call_operand.vmem [shape: f32[8,8,32], index: 9, kind: output, shape index: {0}]
  %s10 = inlined_call_operand.hbm [shape: f32[8,32], index: 10, kind: output, shape index: {1}]
  %s11 = inlined_call_operand.hbm [shape: f32[8,32], index: 11, kind: output, shape index: {2}]
  %12 = xla_tuple %s9, %s10, %s11
  %s13 = sld [smem:[#allocation0]]
  $region62: #{tlstm_forward.1} parent=0
    _
  %s15 = ssub.s32 1, %s13
  %s16 = scalar_select 0, %s15, %s13
  $region1: #{tlstm_forward.1} parent=0
    #allocation3 [shape = 'u8[4096]{0}', space=vmem, size = 0x1000, scoped, tag = 'output window, operand 1, single buffered']
    #allocation4 [shape = 's32[1]{0}', space=sflag, size = 0x4, scoped, tag = 'scoped memory for tlstm_forward.1']
    #allocation5 [shape = 'u8[4096]{0}', space=vmem, size = 0x1000, scoped, tag = 'output window, operand 2, single buffered']
    #allocation6 [shape = 's32[1]{0}', space=sflag, size = 0x4, scoped, tag = 'scoped memory for tlstm_forward.1']
    %17 = vsyncpa [#allocation4], 0
    %18 = vsyncpa [#allocation6], 0
    // Predicated region
    $region2: #{tlstm_forward.1} parent=1 // pred_check
      _
    $region3: #{tlstm_forward.1} parent=1 // pred_check_branch
      %20 = sbr.rel (0) target = $region5
    $region4: #{tlstm_forward.1} parent=1 // pred_region
      _
    $region5: #{tlstm_forward.1} parent=1 // pred_fallthru
      _
    // Predicated region
    $region6: #{tlstm_forward.1} parent=1 // pred_check
      _
    $region7: #{tlstm_forward.1} parent=1 // pred_check_branch
      %22 = sbr.rel (0) target = $region9
    $region8: #{tlstm_forward.1} parent=1 // pred_region
      _
    $region9: #{tlstm_forward.1} parent=1 // pred_fallthru
      _
    // Predicated region
    $region10: #{tlstm_forward.1} parent=1 // pred_check
      _
    $region11: #{tlstm_forward.1} parent=1 // pred_check_branch
      %24 = sbr.rel (0) target = $region13
    $region12: #{tlstm_forward.1} parent=1 // pred_region
      _
    $region13: #{tlstm_forward.1} parent=1 // pred_fallthru
      _
    // Predicated region
    $region14: #{tlstm_forward.1} parent=1 // pred_check
      _
    $region15: #{tlstm_forward.1} parent=1 // pred_check_branch
      %26 = sbr.rel (0) target = $region17
    $region16: #{tlstm_forward.1} parent=1 // pred_region
      _
    $region17: #{tlstm_forward.1} parent=1 // pred_fallthru
      _
    // Predicated region
    $region18: #{tlstm_forward.1} parent=1 // pred_check
      _
    $region19: #{tlstm_forward.1} parent=1 // pred_check_branch
      %28 = sbr.rel (0) target = $region21
    $region20: #{tlstm_forward.1} parent=1 // pred_region
      _
    $region21: #{tlstm_forward.1} parent=1 // pred_fallthru
      _
    // Predicated region
    $region22: #{tlstm_forward.1} parent=1 // pred_check
      _
    $region23: #{tlstm_forward.1} parent=1 // pred_check_branch
      %30 = sbr.rel (0) target = $region25
    $region24: #{tlstm_forward.1} parent=1 // pred_region
      _
    $region25: #{tlstm_forward.1} parent=1 // pred_fallthru
      _
    // Predicated region
    $region26: #{tlstm_forward.1} parent=1 // pred_check
      _
    $region27: #{tlstm_forward.1} parent=1 // pred_check_branch
      %32 = sbr.rel (0) target = $region29
    $region28: #{tlstm_forward.1} parent=1 // pred_region
      _
    $region29: #{tlstm_forward.1} parent=1 // pred_fallthru
      _
    // Predicated region
    $region30: #{tlstm_forward.1} parent=1 // pred_check
      _
    $region31: #{tlstm_forward.1} parent=1 // pred_check_branch
      %34 = sbr.rel (0) target = $region33
    $region32: #{tlstm_forward.1} parent=1 // pred_region
      _
    $region33: #{tlstm_forward.1} parent=1 // pred_fallthru
      _
    // Predicated region
    $region34: #{tlstm_forward.1} parent=1 // pred_check
      _
    $region35: #{tlstm_forward.1} parent=1 // pred_check_branch
      %36 = sbr.rel (0) target = $region37
    $region36: #{tlstm_forward.1} parent=1 // pred_region
      _
    $region37: #{tlstm_forward.1} parent=1 // pred_fallthru
      _
    %v38 = vld [vmem:[%s4] sm:$0xf]
    %v39 = vld [vmem:[%s4 + $0x4] sm:$0xf]
    %v40 = vld [vmem:[%s5] sm:$0xf]
    %v41 = vld [vmem:[%s5 + $0x4] sm:$0xf]
    %v42 = vld [vmem:[%s5 + $0x8] sm:$0xf]
    %v43 = vld [vmem:[%s5 + $0xc] sm:$0xf]
    %v44 = vld [vmem:[%s6] sm:$0x1]
    %v45 = vld [vmem:[%s7] sm:$0xf]
    %v46 = vld [vmem:[%s8] sm:$0x1]
    %v48 = vlaneseq
    %v49 = vshrl.u32 %v48, 7
    %v50 = vsub.s32 0, %v49
    %v51 = vrot.slane %v46, %v50
    %v53 = vld [vmem:[%s1] sm:$0xff]
    %v54 = vld [vmem:[%s0] sm:$0xf]
    %v55 = vld [vmem:[%s0 + $0x4] sm:$0xf]
    %v56 = vld [vmem:[%s0 + $0x8] sm:$0xf]
    %v57 = vld [vmem:[%s0 + $0xc] sm:$0xf]
    %v58 = vld [vmem:[%s0 + $0x10] sm:$0xf]
    %v59 = vld [vmem:[%s0 + $0x14] sm:$0xf]
    %v60 = vld [vmem:[%s0 + $0x18] sm:$0xf]
    %v61 = vld [vmem:[%s0 + $0x1c] sm:$0xf]
    %v63 = vlaneseq
    %v64 = vshrl.u32 %v63, 7
    %v65 = vsub.s32 0, %v64
    %v66 = vrot.slane %v44, %v65
    %v76 = vunpack.c.l.b16 %v54
    %v77 = vunpack.c.l.b16 %v55
    %v78 = vunpack.c.l.b16 %v56
    %v79 = vunpack.c.l.b16 %v57
    %v80 = vunpack.c.l.b16 %v58
    %v81 = vunpack.c.l.b16 %v59
    %v82 = vunpack.c.l.b16 %v60
    %v83 = vunpack.c.l.b16 %v61
    %v84 = vpack.c.b16 %v77, %v76
    %v85 = vpack.c.b16 %v79, %v78
    %v86 = vpack.c.b16 %v81, %v80
    %v87 = vpack.c.b16 %v83, %v82
    %v90 = vunpack.c.l.b16 %v38
    %v91 = vunpack.c.l.b16 %v39
    %v92 = vpack.c.b16 %v91, %v90
    %vm94 = vcmask 130048
    %v96 = vsel %vm94, %v84, 0
    %v99 = vsel %vm94, %v85, 0
    %v102 = vsel %vm94, %v86, 0
    %v105 = vsel %vm94, %v87, 0
    %107 = vmatprep.subr.bf16.mxu0 0
    %108 = vmatpush1.bf16.msra.mxu0 0
    %109 = vmatprep.subr.bf16.mxu0 0
    %110 = vmatpush1.bf16.msra.mxu0 0
    %111 = vmatprep.subr.bf16.mxu0 0
    %112 = vmatpush1.bf16.msra.mxu0 0
    %113 = vmatprep.subr.bf16.mxu0 0
    %114 = vmatpush1.bf16.msra.mxu0 0
    %115 = vmatprep.subr.bf16.mxu0 0
    %116 = vmatpush1.bf16.msra.mxu0 0
    %117 = vmatprep.subr.bf16.mxu0 0
    %118 = vmatpush1.bf16.msra.mxu0 0
    %119 = vmatprep.subr.bf16.mxu0 0
    %120 = vmatpush1.bf16.msra.mxu0 0
    %121 = vmatprep.subr.bf16.mxu0 0
    %122 = vmatpush1.bf16.msra.mxu0 %v92
    %123 = vmatprep.subr.bf16.mxu0 0
    %124 = vmatpush2.bf16.msra.mxu0 0
    %125 = vmatprep.subr.bf16.mxu0 0
    %126 = vmatpush2.bf16.msra.mxu0 0
    %127 = vmatprep.subr.bf16.mxu0 0
    %128 = vmatpush2.bf16.msra.mxu0 0
    %129 = vmatprep.subr.bf16.mxu0 0
    %130 = vmatpush2.bf16.msra.mxu0 0
    %131 = vmatprep.subr.bf16.mxu0 0
    %132 = vmatpush2.bf16.msra.mxu0 0
    %133 = vmatprep.subr.bf16.mxu0 0
    %134 = vmatpush2.bf16.msra.mxu0 0
    %135 = vmatprep.subr.bf16.mxu0 0
    %136 = vmatpush2.bf16.msra.mxu0 0
    %137 = vmatprep.subr.bf16.mxu0 0
    %138 = vmatpush2.bf16.msra.mxu0 0
    %139 = vmatprep.mubr.bf16.mxu0 0
    %140 = vmatmul.mubr.bf16.gmra.mxu0 %v96
    %v141 = vpop.f32.mrf.mxu0
    %v142 = vadd.f32 %v66, %v141
    %v143 = vpop.f32.mrf.mxu0
    %v144 = vpop.f32.mrf.mxu0
    %v145 = vadd.f32 %v66, %v144
    %v146 = vpop.f32.mrf.mxu0
    %147 = vmatprep.mubr.bf16.mxu0 0
    %148 = vmatmul.mubr.bf16.gmra.mxu0 %v99
    %v149 = vpop.f32.mrf.mxu0
    %v150 = vadd.f32 %v66, %v149
    %v151 = vpop.f32.mrf.mxu0
    %v152 = vpop.f32.mrf.mxu0
    %v153 = vadd.f32 %v66, %v152
    %v154 = vpop.f32.mrf.mxu0
    %155 = vmatprep.mubr.bf16.mxu0 0
    %156 = vmatmul.mubr.bf16.gmra.mxu0 %v102
    %v157 = vpop.f32.mrf.mxu0
    %v158 = vadd.f32 %v66, %v157
    %v159 = vpop.f32.mrf.mxu0
    %v160 = vpop.f32.mrf.mxu0
    %v161 = vadd.f32 %v66, %v160
    %v162 = vpop.f32.mrf.mxu0
    %163 = vmatprep.mubr.bf16.mxu0 0
    %164 = vmatmul.mubr.bf16.gmra.mxu0 %v105
    %v165 = vpop.f32.mrf.mxu0
    %v166 = vadd.f32 %v66, %v165
    %v167 = vpop.f32.mrf.mxu0
    %v168 = vpop.f32.mrf.mxu0
    %v169 = vadd.f32 %v66, %v168
    %v170 = vpop.f32.mrf.mxu0
    %171 = vdwg.mxu0
    %172 = vst [vmem:[#allocation2] sm:$0xff] %v142
    %173 = vst [vmem:[#allocation2 + $0x8] sm:$0xff] %v145
    %174 = vst [vmem:[#allocation2 + $0x10] sm:$0xff] %v150
    %175 = vst [vmem:[#allocation2 + $0x18] sm:$0xff] %v153
    %176 = vst [vmem:[#allocation2 + $0x20] sm:$0xff] %v158
    %177 = vst [vmem:[#allocation2 + $0x28] sm:$0xff] %v161
    %178 = vst [vmem:[#allocation2 + $0x30] sm:$0xff] %v166
    %179 = vst [vmem:[#allocation2 + $0x38] sm:$0xff] %v169
    %v180 = vld [vmem:[%s2] sm:$0xff]
    %v181 = vld [vmem:[%s3] sm:$0xff]
    %v182 = vpack.c.bf16 %v53, %v53
    %vm183 = vcmask 64512
    %v185 = vsel %vm183, %v182, 0
    %vm187 = vcmask 1043456
    %v189 = vsel %vm187, %v45, 0
    %191 = vmatprep.subr.bf16.mxu0 0
    %192 = vmatpush1.bf16.msra.mxu0 0
    %193 = vmatprep.subr.bf16.mxu0 0
    %194 = vmatpush1.bf16.msra.mxu0 0
    %195 = vmatprep.subr.bf16.mxu0 0
    %196 = vmatpush1.bf16.msra.mxu0 0
    %197 = vmatprep.subr.bf16.mxu0 0
    %198 = vmatpush1.bf16.msra.mxu0 0
    %199 = vmatprep.subr.bf16.mxu0 0
    %200 = vmatpush1.bf16.msra.mxu0 0
    %201 = vmatprep.subr.bf16.mxu0 0
    %202 = vmatpush1.bf16.msra.mxu0 0
    %203 = vmatprep.subr.bf16.mxu0 0
    %204 = vmatpush1.bf16.msra.mxu0 0
    %205 = vmatprep.subr.bf16.mxu0 0
    %206 = vmatpush1.bf16.msra.mxu0 %v189
    %207 = vmatprep.subr.bf16.mxu0 0
    %208 = vmatpush2.bf16.msra.mxu0 0
    %209 = vmatprep.subr.bf16.mxu0 0
    %210 = vmatpush2.bf16.msra.mxu0 0
    %211 = vmatprep.subr.bf16.mxu0 0
    %212 = vmatpush2.bf16.msra.mxu0 0
    %213 = vmatprep.subr.bf16.mxu0 0
    %214 = vmatpush2.bf16.msra.mxu0 0
    %215 = vmatprep.subr.bf16.mxu0 0
    %216 = vmatpush2.bf16.msra.mxu0 0
    %217 = vmatprep.subr.bf16.mxu0 0
    %218 = vmatpush2.bf16.msra.mxu0 0
    %219 = vmatprep.subr.bf16.mxu0 0
    %220 = vmatpush2.bf16.msra.mxu0 0
    %221 = vmatprep.subr.bf16.mxu0 0
    %222 = vmatpush2.bf16.msra.mxu0 0
    %223 = vmatprep.mubr.bf16.mxu0 0
    %224 = vmatmul.mubr.bf16.gmra.mxu0 %v185
    %v225 = vpop.f32.mrf.mxu0
    %v226 = vadd.f32 %v51, %v225
    %v227 = vpop.f32.mrf.mxu0
    %v228 = vpop.f32.mrf.mxu0
    %v229 = vpop.f32.mrf.mxu0
    %230 = vdwg.mxu0
    %v231 = vld [vmem:[#allocation2] sm:$0xff]
    %v232 = vpack.c.bf16 %v180, %v180
    %v237 = vunpack.c.l.b16 %v40
    %v238 = vunpack.c.l.b16 %v41
    %v239 = vunpack.c.l.b16 %v42
    %v240 = vunpack.c.l.b16 %v43
    %v241 = vpack.c.b16 %v238, %v237
    %v242 = vpack.c.b16 %v240, %v239
    %vm245 = vcmask 261120
    %v247 = vsel %vm245, %v232, 0
    %249 = vmatprep.subr.bf16.mxu0 0
    %250 = vmatpush1.bf16.msra.mxu0 0
    %251 = vmatprep.subr.bf16.mxu0 0
    %252 = vmatpush1.bf16.msra.mxu0 0
    %253 = vmatprep.subr.bf16.mxu0 0
    %254 = vmatpush1.bf16.msra.mxu0 0
    %255 = vmatprep.subr.bf16.mxu0 0
    %256 = vmatpush1.bf16.msra.mxu0 0
    %257 = vmatprep.subr.bf16.mxu0 0
    %258 = vmatpush1.bf16.msra.mxu0 0
    %259 = vmatprep.subr.bf16.mxu0 0
    %260 = vmatpush1.bf16.msra.mxu0 0
    %261 = vmatprep.subr.bf16.mxu0 0
    %262 = vmatpush1.bf16.msra.mxu0 %v242
    %263 = vmatprep.subr.bf16.mxu0 0
    %264 = vmatpush1.bf16.msra.mxu0 %v241
    %265 = vmatprep.subr.bf16.mxu0 0
    %266 = vmatpush2.bf16.msra.mxu0 0
    %267 = vmatprep.subr.bf16.mxu0 0
    %268 = vmatpush2.bf16.msra.mxu0 0
    %269 = vmatprep.subr.bf16.mxu0 0
    %270 = vmatpush2.bf16.msra.mxu0 0
    %271 = vmatprep.subr.bf16.mxu0 0
    %272 = vmatpush2.bf16.msra.mxu0 0
    %273 = vmatprep.subr.bf16.mxu0 0
    %274 = vmatpush2.bf16.msra.mxu0 0
    %275 = vmatprep.subr.bf16.mxu0 0
    %276 = vmatpush2.bf16.msra.mxu0 0
    %277 = vmatprep.subr.bf16.mxu0 0
    %278 = vmatpush2.bf16.msra.mxu0 0
    %279 = vmatprep.subr.bf16.mxu0 0
    %280 = vmatpush2.bf16.msra.mxu0 0
    %281 = vmatprep.mubr.bf16.mxu0 0
    %282 = vmatmul.mubr.bf16.gmra.mxu0 %v247
    %v283 = vpop.f32.mrf.mxu0
    %v284 = vadd.f32 0.0, %v283
    %v285 = vpop.f32.mrf.mxu0
    %v286 = vpop.f32.mrf.mxu0
    %v287 = vpop.f32.mrf.mxu0
    %288 = vdwg.mxu0
    %v289 = vadd.f32 %v231, %v284
    %v290 = vxor.u32 %v289, 2147483648
    %v291 = vmul.f32 %v290, 1.442695
    %v292 = vpow.pop %v291
    %v293 = vadd.f32 %v292, 1.0
    %v294 = vrcp.pop %v293
    %v295 = vmul.f32 1.0, %v294
    %297 = vrot.lane.b32.xlu0 %v226, 32
    %v298 = vpop.permute.xlu0 %297
    %v300 = vmul.f32 %v295, %v298
    %v301 = vtanh.pop %v289
    %v302 = vsub.f32 1.0, %v226
    %304 = vrot.lane.b32.xlu0 %v302, 64
    %v305 = vpop.permute.xlu0 %304
    %v307 = vmul.f32 %v301, %v305
    %309 = vrot.lane.b32.xlu0 %v181, 32
    %v310 = vpop.permute.xlu0 %309
    %v312 = vmul.f32 %v300, %v310
    %314 = vrot.lane.b32.xlu0 %v307, 64
    %v315 = vpop.permute.xlu0 %314
    %v317 = vmul.f32 %v295, %v315
    %319 = vrot.lane.b32.xlu0 %v317, 32
    %v320 = vpop.permute.xlu0 %319
    %v322 = vadd.f32 %v312, %v320
    %v323 = vtanh.pop %v322
    %325 = vrot.lane.b32.xlu0 %v323, 64
    %v326 = vpop.permute.xlu0 %325
    %v328 = vmul.f32 %v295, %v326
    %330 = vrot.lane.b32.xlu0 %v328, 32
    %v331 = vpop.permute.xlu0 %330
    %333 = vst.msk [vmem:[%s9] sm:$0xff] %vm245, %v331
    %v334 = vsub.f32 %v53, %v53
    %v335 = vpack.c.bf16 %v334, %v334
    %v337 = vsel %vm183, %v335, 0
    %339 = vmatprep.subr.bf16.mxu0 0
    %340 = vmatpush1.bf16.msra.mxu0 0
    %341 = vmatprep.subr.bf16.mxu0 0
    %342 = vmatpush1.bf16.msra.mxu0 0
    %343 = vmatprep.subr.bf16.mxu0 0
    %344 = vmatpush1.bf16.msra.mxu0 0
    %345 = vmatprep.subr.bf16.mxu0 0
    %346 = vmatpush1.bf16.msra.mxu0 0
    %347 = vmatprep.subr.bf16.mxu0 0
    %348 = vmatpush1.bf16.msra.mxu0 0
    %349 = vmatprep.subr.bf16.mxu0 0
    %350 = vmatpush1.bf16.msra.mxu0 0
    %351 = vmatprep.subr.bf16.mxu0 0
    %352 = vmatpush1.bf16.msra.mxu0 0
    %353 = vmatprep.subr.bf16.mxu0 0
    %354 = vmatpush1.bf16.msra.mxu0 %v189
    %355 = vmatprep.subr.bf16.mxu0 0
    %356 = vmatpush2.bf16.msra.mxu0 0
    %357 = vmatprep.subr.bf16.mxu0 0
    %358 = vmatpush2.bf16.msra.mxu0 0
    %359 = vmatprep.subr.bf16.mxu0 0
    %360 = vmatpush2.bf16.msra.mxu0 0
    %361 = vmatprep.subr.bf16.mxu0 0
    %362 = vmatpush2.bf16.msra.mxu0 0
    %363 = vmatprep.subr.bf16.mxu0 0
    %364 = vmatpush2.bf16.msra.mxu0 0
    %365 = vmatprep.subr.bf16.mxu0 0
    %366 = vmatpush2.bf16.msra.mxu0 0
    %367 = vmatprep.subr.bf16.mxu0 0
    %368 = vmatpush2.bf16.msra.mxu0 0
    %369 = vmatprep.subr.bf16.mxu0 0
    %370 = vmatpush2.bf16.msra.mxu0 0
    %371 = vmatprep.mubr.bf16.mxu0 0
    %372 = vmatmul.mubr.bf16.gmra.mxu0 %v337
    %v373 = vpop.f32.mrf.mxu0
    %v374 = vadd.f32 %v51, %v373
    %v375 = vpop.f32.mrf.mxu0
    %v376 = vpop.f32.mrf.mxu0
    %v377 = vpop.f32.mrf.mxu0
    %378 = vdwg.mxu0
    %s379 = scalar_lea.vmem [#allocation2], 8
    %v380 = vld [vmem:[%s379] sm:$0xff]
    %v381 = vpack.c.bf16 %v328, %v328
    %383 = vrot.lane.b32.xlu0 %v381, 32
    %v384 = vpop.permute.xlu0 %383
    %v386 = vsel %vm245, %v384, 0
    %388 = vmatprep.subr.bf16.mxu0 0
    %389 = vmatpush1.bf16.msra.mxu0 0
    %390 = vmatprep.subr.bf16.mxu0 0
    %391 = vmatpush1.bf16.msra.mxu0 0
    %392 = vmatprep.subr.bf16.mxu0 0
    %393 = vmatpush1.bf16.msra.mxu0 0
    %394 = vmatprep.subr.bf16.mxu0 0
    %395 = vmatpush1.bf16.msra.mxu0 0
    %396 = vmatprep.subr.bf16.mxu0 0
    %397 = vmatpush1.bf16.msra.mxu0 0
    %398 = vmatprep.subr.bf16.mxu0 0
    %399 = vmatpush1.bf16.msra.mxu0 0
    %400 = vmatprep.subr.bf16.mxu0 0
    %401 = vmatpush1.bf16.msra.mxu0 %v242
    %402 = vmatprep.subr.bf16.mxu0 0
    %403 = vmatpush1.bf16.msra.mxu0 %v241
    %404 = vmatprep.subr.bf16.mxu0 0
    %405 = vmatpush2.bf16.msra.mxu0 0
    %406 = vmatprep.subr.bf16.mxu0 0
    %407 = vmatpush2.bf16.msra.mxu0 0
    %408 = vmatprep.subr.bf16.mxu0 0
    %409 = vmatpush2.bf16.msra.mxu0 0
    %410 = vmatprep.subr.bf16.mxu0 0
    %411 = vmatpush2.bf16.msra.mxu0 0
    %412 = vmatprep.subr.bf16.mxu0 0
    %413 = vmatpush2.bf16.msra.mxu0 0
    %414 = vmatprep.subr.bf16.mxu0 0
    %415 = vmatpush2.bf16.msra.mxu0 0
    %416 = vmatprep.subr.bf16.mxu0 0
    %417 = vmatpush2.bf16.msra.mxu0 0
    %418 = vmatprep.subr.bf16.mxu0 0
    %419 = vmatpush2.bf16.msra.mxu0 0
    %420 = vmatprep.mubr.bf16.mxu0 0
    %421 = vmatmul.mubr.bf16.gmra.mxu0 %v386
    %v422 = vpop.f32.mrf.mxu0
    %v423 = vadd.f32 0.0, %v422
    %v424 = vpop.f32.mrf.mxu0
    %v425 = vpop.f32.mrf.mxu0
    %v426 = vpop.f32.mrf.mxu0
    %427 = vdwg.mxu0
    %v428 = vadd.f32 %v380, %v423
    %v429 = vxor.u32 %v428, 2147483648
    %v430 = vmul.f32 %v429, 1.442695
    %v431 = vpow.pop %v430
    %v432 = vadd.f32 %v431, 1.0
    %v433 = vrcp.pop %v432
    %v434 = vmul.f32 1.0, %v433
    %436 = vrot.lane.b32.xlu0 %v374, 32
    %v437 = vpop.permute.xlu0 %436
    %v439 = vmul.f32 %v434, %v437
    %v440 = vtanh.pop %v428
    %v441 = vsub.f32 1.0, %v374
    %443 = vrot.lane.b32.xlu0 %v441, 64
    %v444 = vpop.permute.xlu0 %443
    %v446 = vmul.f32 %v440, %v444
    %v447 = vmul.f32 %v439, %v322
    %449 = vrot.lane.b32.xlu0 %v446, 64
    %v450 = vpop.permute.xlu0 %449
    %v452 = vmul.f32 %v434, %v450
    %454 = vrot.lane.b32.xlu0 %v452, 32
    %v455 = vpop.permute.xlu0 %454
    %v457 = vadd.f32 %v447, %v455
    %v458 = vtanh.pop %v457
    %460 = vrot.lane.b32.xlu0 %v458, 64
    %v461 = vpop.permute.xlu0 %460
    %v463 = vmul.f32 %v434, %v461
    %465 = vrot.lane.b32.xlu0 %v463, 32
    %v466 = vpop.permute.xlu0 %465
    %s468 = scalar_lea.vmem %s9, 8
    %469 = vst.msk [vmem:[%s468] sm:$0xff] %vm245, %v466
    %v470 = vsub.f32 %v53, %v334
    %v471 = vpack.c.bf16 %v470, %v470
    %v473 = vsel %vm183, %v471, 0
    %475 = vmatprep.subr.bf16.mxu0 0
    %476 = vmatpush1.bf16.msra.mxu0 0
    %477 = vmatprep.subr.bf16.mxu0 0
    %478 = vmatpush1.bf16.msra.mxu0 0
    %479 = vmatprep.subr.bf16.mxu0 0
    %480 = vmatpush1.bf16.msra.mxu0 0
    %481 = vmatprep.subr.bf16.mxu0 0
    %482 = vmatpush1.bf16.msra.mxu0 0
    %483 = vmatprep.subr.bf16.mxu0 0
    %484 = vmatpush1.bf16.msra.mxu0 0
    %485 = vmatprep.subr.bf16.mxu0 0
    %486 = vmatpush1.bf16.msra.mxu0 0
    %487 = vmatprep.subr.bf16.mxu0 0
    %488 = vmatpush1.bf16.msra.mxu0 0
    %489 = vmatprep.subr.bf16.mxu0 0
    %490 = vmatpush1.bf16.msra.mxu0 %v189
    %491 = vmatprep.subr.bf16.mxu0 0
    %492 = vmatpush2.bf16.msra.mxu0 0
    %493 = vmatprep.subr.bf16.mxu0 0
    %494 = vmatpush2.bf16.msra.mxu0 0
    %495 = vmatprep.subr.bf16.mxu0 0
    %496 = vmatpush2.bf16.msra.mxu0 0
    %497 = vmatprep.subr.bf16.mxu0 0
    %498 = vmatpush2.bf16.msra.mxu0 0
    %499 = vmatprep.subr.bf16.mxu0 0
    %500 = vmatpush2.bf16.msra.mxu0 0
    %501 = vmatprep.subr.bf16.mxu0 0
    %502 = vmatpush2.bf16.msra.mxu0 0
    %503 = vmatprep.subr.bf16.mxu0 0
    %504 = vmatpush2.bf16.msra.mxu0 0
    %505 = vmatprep.subr.bf16.mxu0 0
    %506 = vmatpush2.bf16.msra.mxu0 0
    %507 = vmatprep.mubr.bf16.mxu0 0
    %508 = vmatmul.mubr.bf16.gmra.mxu0 %v473
    %v509 = vpop.f32.mrf.mxu0
    %v510 = vadd.f32 %v51, %v509
    %v511 = vpop.f32.mrf.mxu0
    %v512 = vpop.f32.mrf.mxu0
    %v513 = vpop.f32.mrf.mxu0
    %514 = vdwg.mxu0
    %s515 = scalar_lea.vmem [#allocation2], 16
    %v516 = vld [vmem:[%s515] sm:$0xff]
    %v517 = vpack.c.bf16 %v463, %v463
    %519 = vrot.lane.b32.xlu0 %v517, 32
    %v520 = vpop.permute.xlu0 %519
    %v522 = vsel %vm245, %v520, 0
    %524 = vmatprep.subr.bf16.mxu0 0
    %525 = vmatpush1.bf16.msra.mxu0 0
    %526 = vmatprep.subr.bf16.mxu0 0
    %527 = vmatpush1.bf16.msra.mxu0 0
    %528 = vmatprep.subr.bf16.mxu0 0
    %529 = vmatpush1.bf16.msra.mxu0 0
    %530 = vmatprep.subr.bf16.mxu0 0
    %531 = vmatpush1.bf16.msra.mxu0 0
    %532 = vmatprep.subr.bf16.mxu0 0
    %533 = vmatpush1.bf16.msra.mxu0 0
    %534 = vmatprep.subr.bf16.mxu0 0
    %535 = vmatpush1.bf16.msra.mxu0 0
    %536 = vmatprep.subr.bf16.mxu0 0
    %537 = vmatpush1.bf16.msra.mxu0 %v242
    %538 = vmatprep.subr.bf16.mxu0 0
    %539 = vmatpush1.bf16.msra.mxu0 %v241
    %540 = vmatprep.subr.bf16.mxu0 0
    %541 = vmatpush2.bf16.msra.mxu0 0
    %542 = vmatprep.subr.bf16.mxu0 0
    %543 = vmatpush2.bf16.msra.mxu0 0
    %544 = vmatprep.subr.bf16.mxu0 0
    %545 = vmatpush2.bf16.msra.mxu0 0
    %546 = vmatprep.subr.bf16.mxu0 0
    %547 = vmatpush2.bf16.msra.mxu0 0
    %548 = vmatprep.subr.bf16.mxu0 0
    %549 = vmatpush2.bf16.msra.mxu0 0
    %550 = vmatprep.subr.bf16.mxu0 0
    %551 = vmatpush2.bf16.msra.mxu0 0
    %552 = vmatprep.subr.bf16.mxu0 0
    %553 = vmatpush2.bf16.msra.mxu0 0
    %554 = vmatprep.subr.bf16.mxu0 0
    %555 = vmatpush2.bf16.msra.mxu0 0
    %556 = vmatprep.mubr.bf16.mxu0 0
    %557 = vmatmul.mubr.bf16.gmra.mxu0 %v522
    %v558 = vpop.f32.mrf.mxu0
    %v559 = vadd.f32 0.0, %v558
    %v560 = vpop.f32.mrf.mxu0
    %v561 = vpop.f32.mrf.mxu0
    %v562 = vpop.f32.mrf.mxu0
    %563 = vdwg.mxu0
    %v564 = vadd.f32 %v516, %v559
    %v565 = vxor.u32 %v564, 2147483648
    %v566 = vmul.f32 %v565, 1.442695
    %v567 = vpow.pop %v566
    %v568 = vadd.f32 %v567, 1.0
    %v569 = vrcp.pop %v568
    %v570 = vmul.f32 1.0, %v569
    %572 = vrot.lane.b32.xlu0 %v510, 32
    %v573 = vpop.permute.xlu0 %572
    %v575 = vmul.f32 %v570, %v573
    %v576 = vtanh.pop %v564
    %v577 = vsub.f32 1.0, %v510
    %579 = vrot.lane.b32.xlu0 %v577, 64
    %v580 = vpop.permute.xlu0 %579
    %v582 = vmul.f32 %v576, %v580
    %v583 = vmul.f32 %v575, %v457
    %585 = vrot.lane.b32.xlu0 %v582, 64
    %v586 = vpop.permute.xlu0 %585
    %v588 = vmul.f32 %v570, %v586
    %590 = vrot.lane.b32.xlu0 %v588, 32
    %v591 = vpop.permute.xlu0 %590
    %v593 = vadd.f32 %v583, %v591
    %v594 = vtanh.pop %v593
    %596 = vrot.lane.b32.xlu0 %v594, 64
    %v597 = vpop.permute.xlu0 %596
    %v599 = vmul.f32 %v570, %v597
    %601 = vrot.lane.b32.xlu0 %v599, 32
    %v602 = vpop.permute.xlu0 %601
    %s604 = scalar_lea.vmem %s9, 16
    %605 = vst.msk [vmem:[%s604] sm:$0xff] %vm245, %v602
    %v606 = vsub.f32 %v53, %v470
    %v607 = vpack.c.bf16 %v606, %v606
    %v609 = vsel %vm183, %v607, 0
    %611 = vmatprep.subr.bf16.mxu0 0
    %612 = vmatpush1.bf16.msra.mxu0 0
    %613 = vmatprep.subr.bf16.mxu0 0
    %614 = vmatpush1.bf16.msra.mxu0 0
    %615 = vmatprep.subr.bf16.mxu0 0
    %616 = vmatpush1.bf16.msra.mxu0 0
    %617 = vmatprep.subr.bf16.mxu0 0
    %618 = vmatpush1.bf16.msra.mxu0 0
    %619 = vmatprep.subr.bf16.mxu0 0
    %620 = vmatpush1.bf16.msra.mxu0 0
    %621 = vmatprep.subr.bf16.mxu0 0
    %622 = vmatpush1.bf16.msra.mxu0 0
    %623 = vmatprep.subr.bf16.mxu0 0
    %624 = vmatpush1.bf16.msra.mxu0 0
    %625 = vmatprep.subr.bf16.mxu0 0
    %626 = vmatpush1.bf16.msra.mxu0 %v189
    %627 = vmatprep.subr.bf16.mxu0 0
    %628 = vmatpush2.bf16.msra.mxu0 0
    %629 = vmatprep.subr.bf16.mxu0 0
    %630 = vmatpush2.bf16.msra.mxu0 0
    %631 = vmatprep.subr.bf16.mxu0 0
    %632 = vmatpush2.bf16.msra.mxu0 0
    %633 = vmatprep.subr.bf16.mxu0 0
    %634 = vmatpush2.bf16.msra.mxu0 0
    %635 = vmatprep.subr.bf16.mxu0 0
    %636 = vmatpush2.bf16.msra.mxu0 0
    %637 = vmatprep.subr.bf16.mxu0 0
    %638 = vmatpush2.bf16.msra.mxu0 0
    %639 = vmatprep.subr.bf16.mxu0 0
    %640 = vmatpush2.bf16.msra.mxu0 0
    %641 = vmatprep.subr.bf16.mxu0 0
    %642 = vmatpush2.bf16.msra.mxu0 0
    %643 = vmatprep.mubr.bf16.mxu0 0
    %644 = vmatmul.mubr.bf16.gmra.mxu0 %v609
    %v645 = vpop.f32.mrf.mxu0
    %v646 = vadd.f32 %v51, %v645
    %v647 = vpop.f32.mrf.mxu0
    %v648 = vpop.f32.mrf.mxu0
    %v649 = vpop.f32.mrf.mxu0
    %650 = vdwg.mxu0
    %s651 = scalar_lea.vmem [#allocation2], 24
    %v652 = vld [vmem:[%s651] sm:$0xff]
    %v653 = vpack.c.bf16 %v599, %v599
    %655 = vrot.lane.b32.xlu0 %v653, 32
    %v656 = vpop.permute.xlu0 %655
    %v658 = vsel %vm245, %v656, 0
    %660 = vmatprep.subr.bf16.mxu0 0
    %661 = vmatpush1.bf16.msra.mxu0 0
    %662 = vmatprep.subr.bf16.mxu0 0
    %663 = vmatpush1.bf16.msra.mxu0 0
    %664 = vmatprep.subr.bf16.mxu0 0
    %665 = vmatpush1.bf16.msra.mxu0 0
    %666 = vmatprep.subr.bf16.mxu0 0
    %667 = vmatpush1.bf16.msra.mxu0 0
    %668 = vmatprep.subr.bf16.mxu0 0
    %669 = vmatpush1.bf16.msra.mxu0 0
    %670 = vmatprep.subr.bf16.mxu0 0
    %671 = vmatpush1.bf16.msra.mxu0 0
    %672 = vmatprep.subr.bf16.mxu0 0
    %673 = vmatpush1.bf16.msra.mxu0 %v242
    %674 = vmatprep.subr.bf16.mxu0 0
    %675 = vmatpush1.bf16.msra.mxu0 %v241
    %676 = vmatprep.subr.bf16.mxu0 0
    %677 = vmatpush2.bf16.msra.mxu0 0
    %678 = vmatprep.subr.bf16.mxu0 0
    %679 = vmatpush2.bf16.msra.mxu0 0
    %680 = vmatprep.subr.bf16.mxu0 0
    %681 = vmatpush2.bf16.msra.mxu0 0
    %682 = vmatprep.subr.bf16.mxu0 0
    %683 = vmatpush2.bf16.msra.mxu0 0
    %684 = vmatprep.subr.bf16.mxu0 0
    %685 = vmatpush2.bf16.msra.mxu0 0
    %686 = vmatprep.subr.bf16.mxu0 0
    %687 = vmatpush2.bf16.msra.mxu0 0
    %688 = vmatprep.subr.bf16.mxu0 0
    %689 = vmatpush2.bf16.msra.mxu0 0
    %690 = vmatprep.subr.bf16.mxu0 0
    %691 = vmatpush2.bf16.msra.mxu0 0
    %692 = vmatprep.mubr.bf16.mxu0 0
    %693 = vmatmul.mubr.bf16.gmra.mxu0 %v658
    %v694 = vpop.f32.mrf.mxu0
    %v695 = vadd.f32 0.0, %v694
    %v696 = vpop.f32.mrf.mxu0
    %v697 = vpop.f32.mrf.mxu0
    %v698 = vpop.f32.mrf.mxu0
    %699 = vdwg.mxu0
    %v700 = vadd.f32 %v652, %v695
    %v701 = vxor.u32 %v700, 2147483648
    %v702 = vmul.f32 %v701, 1.442695
    %v703 = vpow.pop %v702
    %v704 = vadd.f32 %v703, 1.0
    %v705 = vrcp.pop %v704
    %v706 = vmul.f32 1.0, %v705
    %708 = vrot.lane.b32.xlu0 %v646, 32
    %v709 = vpop.permute.xlu0 %708
    %v711 = vmul.f32 %v706, %v709
    %v712 = vtanh.pop %v700
    %v713 = vsub.f32 1.0, %v646
    %715 = vrot.lane.b32.xlu0 %v713, 64
    %v716 = vpop.permute.xlu0 %715
    %v718 = vmul.f32 %v712, %v716
    %v719 = vmul.f32 %v711, %v593
    %721 = vrot.lane.b32.xlu0 %v718, 64
    %v722 = vpop.permute.xlu0 %721
    %v724 = vmul.f32 %v706, %v722
    %726 = vrot.lane.b32.xlu0 %v724, 32
    %v727 = vpop.permute.xlu0 %726
    %v729 = vadd.f32 %v719, %v727
    %v730 = vtanh.pop %v729
    %732 = vrot.lane.b32.xlu0 %v730, 64
    %v733 = vpop.permute.xlu0 %732
    %v735 = vmul.f32 %v706, %v733
    %737 = vrot.lane.b32.xlu0 %v735, 32
    %v738 = vpop.permute.xlu0 %737
    %s740 = scalar_lea.vmem %s9, 24
    %741 = vst.msk [vmem:[%s740] sm:$0xff] %vm245, %v738
    %v742 = vsub.f32 %v53, %v606
    %v743 = vpack.c.bf16 %v742, %v742
    %v745 = vsel %vm183, %v743, 0
    %747 = vmatprep.subr.bf16.mxu0 0
    %748 = vmatpush1.bf16.msra.mxu0 0
    %749 = vmatprep.subr.bf16.mxu0 0
    %750 = vmatpush1.bf16.msra.mxu0 0
    %751 = vmatprep.subr.bf16.mxu0 0
    %752 = vmatpush1.bf16.msra.mxu0 0
    %753 = vmatprep.subr.bf16.mxu0 0
    %754 = vmatpush1.bf16.msra.mxu0 0
    %755 = vmatprep.subr.bf16.mxu0 0
    %756 = vmatpush1.bf16.msra.mxu0 0
    %757 = vmatprep.subr.bf16.mxu0 0
    %758 = vmatpush1.bf16.msra.mxu0 0
    %759 = vmatprep.subr.bf16.mxu0 0
    %760 = vmatpush1.bf16.msra.mxu0 0
    %761 = vmatprep.subr.bf16.mxu0 0
    %762 = vmatpush1.bf16.msra.mxu0 %v189
    %763 = vmatprep.subr.bf16.mxu0 0
    %764 = vmatpush2.bf16.msra.mxu0 0
    %765 = vmatprep.subr.bf16.mxu0 0
    %766 = vmatpush2.bf16.msra.mxu0 0
    %767 = vmatprep.subr.bf16.mxu0 0
    %768 = vmatpush2.bf16.msra.mxu0 0
    %769 = vmatprep.subr.bf16.mxu0 0
    %770 = vmatpush2.bf16.msra.mxu0 0
    %771 = vmatprep.subr.bf16.mxu0 0
    %772 = vmatpush2.bf16.msra.mxu0 0
    %773 = vmatprep.subr.bf16.mxu0 0
    %774 = vmatpush2.bf16.msra.mxu0 0
    %775 = vmatprep.subr.bf16.mxu0 0
    %776 = vmatpush2.bf16.msra.mxu0 0
    %777 = vmatprep.subr.bf16.mxu0 0
    %778 = vmatpush2.bf16.msra.mxu0 0
    %779 = vmatprep.mubr.bf16.mxu0 0
    %780 = vmatmul.mubr.bf16.gmra.mxu0 %v745
    %v781 = vpop.f32.mrf.mxu0
    %v782 = vadd.f32 %v51, %v781
    %v783 = vpop.f32.mrf.mxu0
    %v784 = vpop.f32.mrf.mxu0
    %v785 = vpop.f32.mrf.mxu0
    %786 = vdwg.mxu0
    %s787 = scalar_lea.vmem [#allocation2], 32
    %v788 = vld [vmem:[%s787] sm:$0xff]
    %v789 = vpack.c.bf16 %v735, %v735
    %791 = vrot.lane.b32.xlu0 %v789, 32
    %v792 = vpop.permute.xlu0 %791
    %v794 = vsel %vm245, %v792, 0
    %796 = vmatprep.subr.bf16.mxu0 0
    %797 = vmatpush1.bf16.msra.mxu0 0
    %798 = vmatprep.subr.bf16.mxu0 0
    %799 = vmatpush1.bf16.msra.mxu0 0
    %800 = vmatprep.subr.bf16.mxu0 0
    %801 = vmatpush1.bf16.msra.mxu0 0
    %802 = vmatprep.subr.bf16.mxu0 0
    %803 = vmatpush1.bf16.msra.mxu0 0
    %804 = vmatprep.subr.bf16.mxu0 0
    %805 = vmatpush1.bf16.msra.mxu0 0
    %806 = vmatprep.subr.bf16.mxu0 0
    %807 = vmatpush1.bf16.msra.mxu0 0
    %808 = vmatprep.subr.bf16.mxu0 0
    %809 = vmatpush1.bf16.msra.mxu0 %v242
    %810 = vmatprep.subr.bf16.mxu0 0
    %811 = vmatpush1.bf16.msra.mxu0 %v241
    %812 = vmatprep.subr.bf16.mxu0 0
    %813 = vmatpush2.bf16.msra.mxu0 0
    %814 = vmatprep.subr.bf16.mxu0 0
    %815 = vmatpush2.bf16.msra.mxu0 0
    %816 = vmatprep.subr.bf16.mxu0 0
    %817 = vmatpush2.bf16.msra.mxu0 0
    %818 = vmatprep.subr.bf16.mxu0 0
    %819 = vmatpush2.bf16.msra.mxu0 0
    %820 = vmatprep.subr.bf16.mxu0 0
    %821 = vmatpush2.bf16.msra.mxu0 0
    %822 = vmatprep.subr.bf16.mxu0 0
    %823 = vmatpush2.bf16.msra.mxu0 0
    %824 = vmatprep.subr.bf16.mxu0 0
    %825 = vmatpush2.bf16.msra.mxu0 0
    %826 = vmatprep.subr.bf16.mxu0 0
    %827 = vmatpush2.bf16.msra.mxu0 0
    %828 = vmatprep.mubr.bf16.mxu0 0
    %829 = vmatmul.mubr.bf16.gmra.mxu0 %v794
    %v830 = vpop.f32.mrf.mxu0
    %v831 = vadd.f32 0.0, %v830
    %v832 = vpop.f32.mrf.mxu0
    %v833 = vpop.f32.mrf.mxu0
    %v834 = vpop.f32.mrf.mxu0
    %835 = vdwg.mxu0
    %v836 = vadd.f32 %v788, %v831
    %v837 = vxor.u32 %v836, 2147483648
    %v838 = vmul.f32 %v837, 1.442695
    %v839 = vpow.pop %v838
    %v840 = vadd.f32 %v839, 1.0
    %v841 = vrcp.pop %v840
    %v842 = vmul.f32 1.0, %v841
    %844 = vrot.lane.b32.xlu0 %v782, 32
    %v845 = vpop.permute.xlu0 %844
    %v847 = vmul.f32 %v842, %v845
    %v848 = vtanh.pop %v836
    %v849 = vsub.f32 1.0, %v782
    %851 = vrot.lane.b32.xlu0 %v849, 64
    %v852 = vpop.permute.xlu0 %851
    %v854 = vmul.f32 %v848, %v852
    %v855 = vmul.f32 %v847, %v729
    %857 = vrot.lane.b32.xlu0 %v854, 64
    %v858 = vpop.permute.xlu0 %857
    %v860 = vmul.f32 %v842, %v858
    %862 = vrot.lane.b32.xlu0 %v860, 32
    %v863 = vpop.permute.xlu0 %862
    %v865 = vadd.f32 %v855, %v863
    %v866 = vtanh.pop %v865
    %868 = vrot.lane.b32.xlu0 %v866, 64
    %v869 = vpop.permute.xlu0 %868
    %v871 = vmul.f32 %v842, %v869
    %873 = vrot.lane.b32.xlu0 %v871, 32
    %v874 = vpop.permute.xlu0 %873
    %s876 = scalar_lea.vmem %s9, 32
    %877 = vst.msk [vmem:[%s876] sm:$0xff] %vm245, %v874
    %v878 = vsub.f32 %v53, %v742
    %v879 = vpack.c.bf16 %v878, %v878
    %v881 = vsel %vm183, %v879, 0
    %883 = vmatprep.subr.bf16.mxu0 0
    %884 = vmatpush1.bf16.msra.mxu0 0
    %885 = vmatprep.subr.bf16.mxu0 0
    %886 = vmatpush1.bf16.msra.mxu0 0
    %887 = vmatprep.subr.bf16.mxu0 0
    %888 = vmatpush1.bf16.msra.mxu0 0
    %889 = vmatprep.subr.bf16.mxu0 0
    %890 = vmatpush1.bf16.msra.mxu0 0
    %891 = vmatprep.subr.bf16.mxu0 0
    %892 = vmatpush1.bf16.msra.mxu0 0
    %893 = vmatprep.subr.bf16.mxu0 0
    %894 = vmatpush1.bf16.msra.mxu0 0
    %895 = vmatprep.subr.bf16.mxu0 0
    %896 = vmatpush1.bf16.msra.mxu0 0
    %897 = vmatprep.subr.bf16.mxu0 0
    %898 = vmatpush1.bf16.msra.mxu0 %v189
    %899 = vmatprep.subr.bf16.mxu0 0
    %900 = vmatpush2.bf16.msra.mxu0 0
    %901 = vmatprep.subr.bf16.mxu0 0
    %902 = vmatpush2.bf16.msra.mxu0 0
    %903 = vmatprep.subr.bf16.mxu0 0
    %904 = vmatpush2.bf16.msra.mxu0 0
    %905 = vmatprep.subr.bf16.mxu0 0
    %906 = vmatpush2.bf16.msra.mxu0 0
    %907 = vmatprep.subr.bf16.mxu0 0
    %908 = vmatpush2.bf16.msra.mxu0 0
    %909 = vmatprep.subr.bf16.mxu0 0
    %910 = vmatpush2.bf16.msra.mxu0 0
    %911 = vmatprep.subr.bf16.mxu0 0
    %912 = vmatpush2.bf16.msra.mxu0 0
    %913 = vmatprep.subr.bf16.mxu0 0
    %914 = vmatpush2.bf16.msra.mxu0 0
    %915 = vmatprep.mubr.bf16.mxu0 0
    %916 = vmatmul.mubr.bf16.gmra.mxu0 %v881
    %v917 = vpop.f32.mrf.mxu0
    %v918 = vadd.f32 %v51, %v917
    %v919 = vpop.f32.mrf.mxu0
    %v920 = vpop.f32.mrf.mxu0
    %v921 = vpop.f32.mrf.mxu0
    %922 = vdwg.mxu0
    %s923 = scalar_lea.vmem [#allocation2], 40
    %v924 = vld [vmem:[%s923] sm:$0xff]
    %v925 = vpack.c.bf16 %v871, %v871
    %927 = vrot.lane.b32.xlu0 %v925, 32
    %v928 = vpop.permute.xlu0 %927
    %v930 = vsel %vm245, %v928, 0
    %932 = vmatprep.subr.bf16.mxu0 0
    %933 = vmatpush1.bf16.msra.mxu0 0
    %934 = vmatprep.subr.bf16.mxu0 0
    %935 = vmatpush1.bf16.msra.mxu0 0
    %936 = vmatprep.subr.bf16.mxu0 0
    %937 = vmatpush1.bf16.msra.mxu0 0
    %938 = vmatprep.subr.bf16.mxu0 0
    %939 = vmatpush1.bf16.msra.mxu0 0
    %940 = vmatprep.subr.bf16.mxu0 0
    %941 = vmatpush1.bf16.msra.mxu0 0
    %942 = vmatprep.subr.bf16.mxu0 0
    %943 = vmatpush1.bf16.msra.mxu0 0
    %944 = vmatprep.subr.bf16.mxu0 0
    %945 = vmatpush1.bf16.msra.mxu0 %v242
    %946 = vmatprep.subr.bf16.mxu0 0
    %947 = vmatpush1.bf16.msra.mxu0 %v241
    %948 = vmatprep.subr.bf16.mxu0 0
    %949 = vmatpush2.bf16.msra.mxu0 0
    %950 = vmatprep.subr.bf16.mxu0 0
    %951 = vmatpush2.bf16.msra.mxu0 0
    %952 = vmatprep.subr.bf16.mxu0 0
    %953 = vmatpush2.bf16.msra.mxu0 0
    %954 = vmatprep.subr.bf16.mxu0 0
    %955 = vmatpush2.bf16.msra.mxu0 0
    %956 = vmatprep.subr.bf16.mxu0 0
    %957 = vmatpush2.bf16.msra.mxu0 0
    %958 = vmatprep.subr.bf16.mxu0 0
    %959 = vmatpush2.bf16.msra.mxu0 0
    %960 = vmatprep.subr.bf16.mxu0 0
    %961 = vmatpush2.bf16.msra.mxu0 0
    %962 = vmatprep.subr.bf16.mxu0 0
    %963 = vmatpush2.bf16.msra.mxu0 0
    %964 = vmatprep.mubr.bf16.mxu0 0
    %965 = vmatmul.mubr.bf16.gmra.mxu0 %v930
    %v966 = vpop.f32.mrf.mxu0
    %v967 = vadd.f32 0.0, %v966
    %v968 = vpop.f32.mrf.mxu0
    %v969 = vpop.f32.mrf.mxu0
    %v970 = vpop.f32.mrf.mxu0
    %971 = vdwg.mxu0
    %v972 = vadd.f32 %v924, %v967
    %v973 = vxor.u32 %v972, 2147483648
    %v974 = vmul.f32 %v973, 1.442695
    %v975 = vpow.pop %v974
    %v976 = vadd.f32 %v975, 1.0
    %v977 = vrcp.pop %v976
    %v978 = vmul.f32 1.0, %v977
    %980 = vrot.lane.b32.xlu0 %v918, 32
    %v981 = vpop.permute.xlu0 %980
    %v983 = vmul.f32 %v978, %v981
    %v984 = vtanh.pop %v972
    %v985 = vsub.f32 1.0, %v918
    %987 = vrot.lane.b32.xlu0 %v985, 64
    %v988 = vpop.permute.xlu0 %987
    %v990 = vmul.f32 %v984, %v988
    %v991 = vmul.f32 %v983, %v865
    %993 = vrot.lane.b32.xlu0 %v990, 64
    %v994 = vpop.permute.xlu0 %993
    %v996 = vmul.f32 %v978, %v994
    %998 = vrot.lane.b32.xlu0 %v996, 32
    %v999 = vpop.permute.xlu0 %998
    %v1001 = vadd.f32 %v991, %v999
    %v1002 = vtanh.pop %v1001
    %1004 = vrot.lane.b32.xlu0 %v1002, 64
    %v1005 = vpop.permute.xlu0 %1004
    %v1007 = vmul.f32 %v978, %v1005
    %1009 = vrot.lane.b32.xlu0 %v1007, 32
    %v1010 = vpop.permute.xlu0 %1009
    %s1012 = scalar_lea.vmem %s9, 40
    %1013 = vst.msk [vmem:[%s1012] sm:$0xff] %vm245, %v1010
    %v1014 = vsub.f32 %v53, %v878
    %v1015 = vpack.c.bf16 %v1014, %v1014
    %v1017 = vsel %vm183, %v1015, 0
    %1019 = vmatprep.subr.bf16.mxu0 0
    %1020 = vmatpush1.bf16.msra.mxu0 0
    %1021 = vmatprep.subr.bf16.mxu0 0
    %1022 = vmatpush1.bf16.msra.mxu0 0
    %1023 = vmatprep.subr.bf16.mxu0 0
    %1024 = vmatpush1.bf16.msra.mxu0 0
    %1025 = vmatprep.subr.bf16.mxu0 0
    %1026 = vmatpush1.bf16.msra.mxu0 0
    %1027 = vmatprep.subr.bf16.mxu0 0
    %1028 = vmatpush1.bf16.msra.mxu0 0
    %1029 = vmatprep.subr.bf16.mxu0 0
    %1030 = vmatpush1.bf16.msra.mxu0 0
    %1031 = vmatprep.subr.bf16.mxu0 0
    %1032 = vmatpush1.bf16.msra.mxu0 0
    %1033 = vmatprep.subr.bf16.mxu0 0
    %1034 = vmatpush1.bf16.msra.mxu0 %v189
    %1035 = vmatprep.subr.bf16.mxu0 0
    %1036 = vmatpush2.bf16.msra.mxu0 0
    %1037 = vmatprep.subr.bf16.mxu0 0
    %1038 = vmatpush2.bf16.msra.mxu0 0
    %1039 = vmatprep.subr.bf16.mxu0 0
    %1040 = vmatpush2.bf16.msra.mxu0 0
    %1041 = vmatprep.subr.bf16.mxu0 0
    %1042 = vmatpush2.bf16.msra.mxu0 0
    %1043 = vmatprep.subr.bf16.mxu0 0
    %1044 = vmatpush2.bf16.msra.mxu0 0
    %1045 = vmatprep.subr.bf16.mxu0 0
    %1046 = vmatpush2.bf16.msra.mxu0 0
    %1047 = vmatprep.subr.bf16.mxu0 0
    %1048 = vmatpush2.bf16.msra.mxu0 0
    %1049 = vmatprep.subr.bf16.mxu0 0
    %1050 = vmatpush2.bf16.msra.mxu0 0
    %1051 = vmatprep.mubr.bf16.mxu0 0
    %1052 = vmatmul.mubr.bf16.gmra.mxu0 %v1017
    %v1053 = vpop.f32.mrf.mxu0
    %v1054 = vadd.f32 %v51, %v1053
    %v1055 = vpop.f32.mrf.mxu0
    %v1056 = vpop.f32.mrf.mxu0
    %v1057 = vpop.f32.mrf.mxu0
    %1058 = vdwg.mxu0
    %s1059 = scalar_lea.vmem [#allocation2], 48
    %v1060 = vld [vmem:[%s1059] sm:$0xff]
    %v1061 = vpack.c.bf16 %v1007, %v1007
    %1063 = vrot.lane.b32.xlu0 %v1061, 32
    %v1064 = vpop.permute.xlu0 %1063
    %v1066 = vsel %vm245, %v1064, 0
    %1068 = vmatprep.subr.bf16.mxu0 0
    %1069 = vmatpush1.bf16.msra.mxu0 0
    %1070 = vmatprep.subr.bf16.mxu0 0
    %1071 = vmatpush1.bf16.msra.mxu0 0
    %1072 = vmatprep.subr.bf16.mxu0 0
    %1073 = vmatpush1.bf16.msra.mxu0 0
    %1074 = vmatprep.subr.bf16.mxu0 0
    %1075 = vmatpush1.bf16.msra.mxu0 0
    %1076 = vmatprep.subr.bf16.mxu0 0
    %1077 = vmatpush1.bf16.msra.mxu0 0
    %1078 = vmatprep.subr.bf16.mxu0 0
    %1079 = vmatpush1.bf16.msra.mxu0 0
    %1080 = vmatprep.subr.bf16.mxu0 0
    %1081 = vmatpush1.bf16.msra.mxu0 %v242
    %1082 = vmatprep.subr.bf16.mxu0 0
    %1083 = vmatpush1.bf16.msra.mxu0 %v241
    %1084 = vmatprep.subr.bf16.mxu0 0
    %1085 = vmatpush2.bf16.msra.mxu0 0
    %1086 = vmatprep.subr.bf16.mxu0 0
    %1087 = vmatpush2.bf16.msra.mxu0 0
    %1088 = vmatprep.subr.bf16.mxu0 0
    %1089 = vmatpush2.bf16.msra.mxu0 0
    %1090 = vmatprep.subr.bf16.mxu0 0
    %1091 = vmatpush2.bf16.msra.mxu0 0
    %1092 = vmatprep.subr.bf16.mxu0 0
    %1093 = vmatpush2.bf16.msra.mxu0 0
    %1094 = vmatprep.subr.bf16.mxu0 0
    %1095 = vmatpush2.bf16.msra.mxu0 0
    %1096 = vmatprep.subr.bf16.mxu0 0
    %1097 = vmatpush2.bf16.msra.mxu0 0
    %1098 = vmatprep.subr.bf16.mxu0 0
    %1099 = vmatpush2.bf16.msra.mxu0 0
    %1100 = vmatprep.mubr.bf16.mxu0 0
    %1101 = vmatmul.mubr.bf16.gmra.mxu0 %v1066
    %v1102 = vpop.f32.mrf.mxu0
    %v1103 = vadd.f32 0.0, %v1102
    %v1104 = vpop.f32.mrf.mxu0
    %v1105 = vpop.f32.mrf.mxu0
    %v1106 = vpop.f32.mrf.mxu0
    %1107 = vdwg.mxu0
    %v1108 = vadd.f32 %v1060, %v1103
    %v1109 = vxor.u32 %v1108, 2147483648
    %v1110 = vmul.f32 %v1109, 1.442695
    %v1111 = vpow.pop %v1110
    %v1112 = vadd.f32 %v1111, 1.0
    %v1113 = vrcp.pop %v1112
    %v1114 = vmul.f32 1.0, %v1113
    %1116 = vrot.lane.b32.xlu0 %v1054, 32
    %v1117 = vpop.permute.xlu0 %1116
    %v1119 = vmul.f32 %v1114, %v1117
    %v1120 = vtanh.pop %v1108
    %v1121 = vsub.f32 1.0, %v1054
    %1123 = vrot.lane.b32.xlu0 %v1121, 64
    %v1124 = vpop.permute.xlu0 %1123
    %v1126 = vmul.f32 %v1120, %v1124
    %v1127 = vmul.f32 %v1119, %v1001
    %1129 = vrot.lane.b32.xlu0 %v1126, 64
    %v1130 = vpop.permute.xlu0 %1129
    %v1132 = vmul.f32 %v1114, %v1130
    %1134 = vrot.lane.b32.xlu0 %v1132, 32
    %v1135 = vpop.permute.xlu0 %1134
    %v1137 = vadd.f32 %v1127, %v1135
    %v1138 = vtanh.pop %v1137
    %1140 = vrot.lane.b32.xlu0 %v1138, 64
    %v1141 = vpop.permute.xlu0 %1140
    %v1143 = vmul.f32 %v1114, %v1141
    %1145 = vrot.lane.b32.xlu0 %v1143, 32
    %v1146 = vpop.permute.xlu0 %1145
    %s1148 = scalar_lea.vmem %s9, 48
    %1149 = vst.msk [vmem:[%s1148] sm:$0xff] %vm245, %v1146
    %v1150 = vsub.f32 %v53, %v1014
    %v1151 = vpack.c.bf16 %v1150, %v1150
    %v1153 = vsel %vm183, %v1151, 0
    %1155 = vmatprep.subr.bf16.mxu0 0
    %1156 = vmatpush1.bf16.msra.mxu0 0
    %1157 = vmatprep.subr.bf16.mxu0 0
    %1158 = vmatpush1.bf16.msra.mxu0 0
    %1159 = vmatprep.subr.bf16.mxu0 0
    %1160 = vmatpush1.bf16.msra.mxu0 0
    %1161 = vmatprep.subr.bf16.mxu0 0
    %1162 = vmatpush1.bf16.msra.mxu0 0
    %1163 = vmatprep.subr.bf16.mxu0 0
    %1164 = vmatpush1.bf16.msra.mxu0 0
    %1165 = vmatprep.subr.bf16.mxu0 0
    %1166 = vmatpush1.bf16.msra.mxu0 0
    %1167 = vmatprep.subr.bf16.mxu0 0
    %1168 = vmatpush1.bf16.msra.mxu0 0
    %1169 = vmatprep.subr.bf16.mxu0 0
    %1170 = vmatpush1.bf16.msra.mxu0 %v189
    %1171 = vmatprep.subr.bf16.mxu0 0
    %1172 = vmatpush2.bf16.msra.mxu0 0
    %1173 = vmatprep.subr.bf16.mxu0 0
    %1174 = vmatpush2.bf16.msra.mxu0 0
    %1175 = vmatprep.subr.bf16.mxu0 0
    %1176 = vmatpush2.bf16.msra.mxu0 0
    %1177 = vmatprep.subr.bf16.mxu0 0
    %1178 = vmatpush2.bf16.msra.mxu0 0
    %1179 = vmatprep.subr.bf16.mxu0 0
    %1180 = vmatpush2.bf16.msra.mxu0 0
    %1181 = vmatprep.subr.bf16.mxu0 0
    %1182 = vmatpush2.bf16.msra.mxu0 0
    %1183 = vmatprep.subr.bf16.mxu0 0
    %1184 = vmatpush2.bf16.msra.mxu0 0
    %1185 = vmatprep.subr.bf16.mxu0 0
    %1186 = vmatpush2.bf16.msra.mxu0 0
    %1187 = vmatprep.mubr.bf16.mxu0 0
    %1188 = vmatmul.mubr.bf16.gmra.mxu0 %v1153
    %v1189 = vpop.f32.mrf.mxu0
    %v1190 = vadd.f32 %v51, %v1189
    %v1191 = vpop.f32.mrf.mxu0
    %v1192 = vpop.f32.mrf.mxu0
    %v1193 = vpop.f32.mrf.mxu0
    %1194 = vdwg.mxu0
    %s1195 = scalar_lea.vmem [#allocation2], 56
    %v1196 = vld [vmem:[%s1195] sm:$0xff]
    %v1197 = vpack.c.bf16 %v1143, %v1143
    %1199 = vrot.lane.b32.xlu0 %v1197, 32
    %v1200 = vpop.permute.xlu0 %1199
    %v1202 = vsel %vm245, %v1200, 0
    %1204 = vmatprep.subr.bf16.mxu0 0
    %1205 = vmatpush1.bf16.msra.mxu0 0
    %1206 = vmatprep.subr.bf16.mxu0 0
    %1207 = vmatpush1.bf16.msra.mxu0 0
    %1208 = vmatprep.subr.bf16.mxu0 0
    %1209 = vmatpush1.bf16.msra.mxu0 0
    %1210 = vmatprep.subr.bf16.mxu0 0
    %1211 = vmatpush1.bf16.msra.mxu0 0
    %1212 = vmatprep.subr.bf16.mxu0 0
    %1213 = vmatpush1.bf16.msra.mxu0 0
    %1214 = vmatprep.subr.bf16.mxu0 0
    %1215 = vmatpush1.bf16.msra.mxu0 0
    %1216 = vmatprep.subr.bf16.mxu0 0
    %1217 = vmatpush1.bf16.msra.mxu0 %v242
    %1218 = vmatprep.subr.bf16.mxu0 0
    %1219 = vmatpush1.bf16.msra.mxu0 %v241
    %1220 = vmatprep.subr.bf16.mxu0 0
    %1221 = vmatpush2.bf16.msra.mxu0 0
    %1222 = vmatprep.subr.bf16.mxu0 0
    %1223 = vmatpush2.bf16.msra.mxu0 0
    %1224 = vmatprep.subr.bf16.mxu0 0
    %1225 = vmatpush2.bf16.msra.mxu0 0
    %1226 = vmatprep.subr.bf16.mxu0 0
    %1227 = vmatpush2.bf16.msra.mxu0 0
    %1228 = vmatprep.subr.bf16.mxu0 0
    %1229 = vmatpush2.bf16.msra.mxu0 0
    %1230 = vmatprep.subr.bf16.mxu0 0
    %1231 = vmatpush2.bf16.msra.mxu0 0
    %1232 = vmatprep.subr.bf16.mxu0 0
    %1233 = vmatpush2.bf16.msra.mxu0 0
    %1234 = vmatprep.subr.bf16.mxu0 0
    %1235 = vmatpush2.bf16.msra.mxu0 0
    %1236 = vmatprep.mubr.bf16.mxu0 0
    %1237 = vmatmul.mubr.bf16.gmra.mxu0 %v1202
    %v1238 = vpop.f32.mrf.mxu0
    %v1239 = vadd.f32 0.0, %v1238
    %v1240 = vpop.f32.mrf.mxu0
    %v1241 = vpop.f32.mrf.mxu0
    %v1242 = vpop.f32.mrf.mxu0
    %1243 = vdwg.mxu0
    %v1244 = vadd.f32 %v1196, %v1239
    %v1245 = vxor.u32 %v1244, 2147483648
    %v1246 = vmul.f32 %v1245, 1.442695
    %v1247 = vpow.pop %v1246
    %v1248 = vadd.f32 %v1247, 1.0
    %v1249 = vrcp.pop %v1248
    %v1250 = vmul.f32 1.0, %v1249
    %1252 = vrot.lane.b32.xlu0 %v1190, 32
    %v1253 = vpop.permute.xlu0 %1252
    %v1255 = vmul.f32 %v1250, %v1253
    %v1256 = vtanh.pop %v1244
    %v1257 = vsub.f32 1.0, %v1190
    %1259 = vrot.lane.b32.xlu0 %v1257, 64
    %v1260 = vpop.permute.xlu0 %1259
    %v1262 = vmul.f32 %v1256, %v1260
    %v1263 = vmul.f32 %v1255, %v1137
    %1265 = vrot.lane.b32.xlu0 %v1262, 64
    %v1266 = vpop.permute.xlu0 %1265
    %v1268 = vmul.f32 %v1250, %v1266
    %1270 = vrot.lane.b32.xlu0 %v1268, 32
    %v1271 = vpop.permute.xlu0 %1270
    %v1273 = vadd.f32 %v1263, %v1271
    %v1274 = vtanh.pop %v1273
    %1276 = vrot.lane.b32.xlu0 %v1274, 64
    %v1277 = vpop.permute.xlu0 %1276
    %v1279 = vmul.f32 %v1250, %v1277
    %1281 = vrot.lane.b32.xlu0 %v1279, 32
    %v1282 = vpop.permute.xlu0 %1281
    %s1284 = scalar_lea.vmem %s9, 56
    %1285 = vst.msk [vmem:[%s1284] sm:$0xff] %vm245, %v1282
    %1286 = vst.msk [vmem:[#allocation3] sm:$0xff] %vm245, %v1282
    %1288 = vrot.lane.b32.xlu0 %v1273, 96
    %v1289 = vpop.permute.xlu0 %1288
    %1291 = vst.msk [vmem:[#allocation5] sm:$0xff] %vm245, %v1289
    // Predicated region
    $region38: #{tlstm_forward.1} parent=1 // pred_check
      _
    $region39: #{tlstm_forward.1} parent=1 // pred_check_branch
      %1293 = sbr.rel (0) target = $region41
    $region40: #{tlstm_forward.1} parent=1 // pred_region
      _
    $region41: #{tlstm_forward.1} parent=1 // pred_fallthru
      _
    // Predicated region
    $region42: #{tlstm_forward.1} parent=1 // pred_check
      _
    $region43: #{tlstm_forward.1} parent=1 // pred_check_branch
      %1295 = sbr.rel (0) target = $region45
    $region44: #{tlstm_forward.1} parent=1 // pred_region
      %s1297 = ssub.s32 128, 128
      %1298 = vsyncadd [#allocation4], %s1297
      %s1300 = sshll.u32 [#allocation3], 4
      %s1301 = int_to_ptr.vmem [resolvable:$true] %s1300
      %1303 = dma.vmem_to_hbm [thread:$0]  %s1301, 128, %s10, [#allocation4]
    $region45: #{tlstm_forward.1} parent=1 // pred_fallthru
      _
    // Predicated region
    $region46: #{tlstm_forward.1} parent=1 // pred_check
      _
    $region47: #{tlstm_forward.1} parent=1 // pred_check_branch
      %1305 = sbr.rel (0) target = $region49
    $region48: #{tlstm_forward.1} parent=1 // pred_region
      %s1307 = ssub.s32 128, 128
      %1308 = vsyncadd [#allocation6], %s1307
      %s1310 = sshll.u32 [#allocation5], 4
      %s1311 = int_to_ptr.vmem [resolvable:$true] %s1310
      %1313 = dma.vmem_to_hbm [thread:$0]  %s1311, 128, %s11, [#allocation6]
    $region49: #{tlstm_forward.1} parent=1 // pred_fallthru
      _
    // Predicated region
    $region50: #{tlstm_forward.1} parent=1 // pred_check
      _
    $region51: #{tlstm_forward.1} parent=1 // pred_check_branch
      %1315 = sbr.rel (0) target = $region53
    $region52: #{tlstm_forward.1} parent=1 // pred_region
      _
    $region53: #{tlstm_forward.1} parent=1 // pred_fallthru
      _
    // Predicated region
    $region54: #{tlstm_forward.1} parent=1 // pred_check
      _
    $region55: #{tlstm_forward.1} parent=1 // pred_check_branch
      %1317 = sbr.rel (0) target = $region57
    $region56: #{tlstm_forward.1} parent=1 // pred_region
      %1318 = dma.done [#allocation4], 128
    $region57: #{tlstm_forward.1} parent=1 // pred_fallthru
      _
    // Predicated region
    $region58: #{tlstm_forward.1} parent=1 // pred_check
      _
    $region59: #{tlstm_forward.1} parent=1 // pred_check_branch
      %1320 = sbr.rel (0) target = $region61
    $region60: #{tlstm_forward.1} parent=1 // pred_region
      %1321 = dma.done [#allocation6], 128
    $region61: #{tlstm_forward.1} parent=1 // pred_fallthru
      _
    %1322 = vsyncpa [#allocation4], 1
    %1323 = vsyncpa [#allocation6], 1

</llo_original>
